<compile_context>
chip_gen: v5e
topology: v5e:2x2
jax: 0.10.0
libtpu: 0.0.40
codegen_flags: <defaults>
</compile_context>

<pallas_src>
import functools

import jax
import jax.numpy as jnp
from jax import lax
from jax.experimental import pallas as pl
from jax.experimental.pallas import tpu as pltpu


def _lstm_lm_kernel(num_layers, seq_len, vocab, hidden, out_size, *refs):
    """Whole forward pass in one invocation: embedding gather (one-hot matmul
    on the MXU), stacked LSTM recurrence (fully unrolled, register-resident
    state), and decoder matmul.  All operands are tiny and live in VMEM."""
    idx = 0
    tok_ref = refs[idx]; idx += 1          # (S, 1)   int32
    emb_ref = refs[idx]; idx += 1          # (V, E)   f32
    h0_ref = refs[idx]; idx += 1           # (L, 1, H) f32
    c0_ref = refs[idx]; idx += 1           # (L, 1, H) f32
    wih, whh, bih, bhh = [], [], [], []
    for _ in range(num_layers):
        wih.append(refs[idx]); idx += 1    # (in_l, 4H)
        whh.append(refs[idx]); idx += 1    # (H, 4H)
        bih.append(refs[idx]); idx += 1    # (1, 4H)
        bhh.append(refs[idx]); idx += 1    # (1, 4H)
    dec_w_ref = refs[idx]; idx += 1        # (H, O)
    dec_b_ref = refs[idx]; idx += 1        # (1, O)
    out_ref = refs[idx]; idx += 1          # (S, O)
    hn_ref = refs[idx]; idx += 1           # (L, 1, H)
    cn_ref = refs[idx]; idx += 1           # (L, 1, H)

    H = hidden

    # ---- embedding: gather expressed as one-hot @ table (runs on the MXU) ----
    # TODO(synk): for production-sized vocabularies (esp. v7x's 64 MiB VMEM),
    # replace with an HBM-resident table + scalar-prefetched row gather.
    tok = tok_ref[...]                                           # (S, 1) int32
    iota_v = lax.broadcasted_iota(jnp.int32, (seq_len, vocab), 1)
    onehot = (tok == iota_v).astype(jnp.float32)                 # (S, V)
    x = jnp.dot(onehot, emb_ref[...],
                preferred_element_type=jnp.float32)              # (S, E)

    # ---- stacked LSTM layers (each layer consumes the full sequence) ----
    for l in range(num_layers):
        Wh = whh[l][...]                                         # (H, 4H)
        b = bih[l][...] + bhh[l][...]                            # (1, 4H)
        # Input-to-hidden contribution for the whole sequence, hoisted out of
        # the sequential recurrence and kept as a value (one vreg at S=8,
        # 4H=128) -- no VMEM round trip.
        xg = jnp.dot(x, wih[l][...],
                     preferred_element_type=jnp.float32) + b     # (S, 4H)
        h = h0_ref[l]                                            # (1, H)
        c = c0_ref[l]                                            # (1, H)

        hs = []
        # Fully unrolled serial recurrence: static indices, state in vregs.
        for t in range(seq_len):
            g = xg[t:t + 1, :] + jnp.dot(
                h, Wh, preferred_element_type=jnp.float32)       # (1, 4H)
            i_g = jax.nn.sigmoid(g[:, 0 * H:1 * H])
            f_g = jax.nn.sigmoid(g[:, 1 * H:2 * H])
            g_g = jnp.tanh(g[:, 2 * H:3 * H])
            o_g = jax.nn.sigmoid(g[:, 3 * H:4 * H])
            c = f_g * c + i_g * g_g
            h = o_g * jnp.tanh(c)
            hs.append(h)

        hn_ref[l] = h
        cn_ref[l] = c
        # One (S, H) value per layer; written to HBM only via the decoder or
        # consumed directly by the next layer -- no per-step masked stores.
        x = jnp.concatenate(hs, axis=0)                          # (S, H)

    # ---- decoder (single lane-aligned store) ----
    out_ref[...] = jnp.dot(x, dec_w_ref[...],
                           preferred_element_type=jnp.float32) + dec_b_ref[...]


def rnn_forward(tokens, emb_w, lstm_params, dec_w, dec_b, h0, c0):
    """Pallas wrapper.  lstm_params: list of (W_ih (4H,in), W_hh (4H,H),
    b_ih (4H,), b_hh (4H,)) in torch layout; transposed here (glue)."""
    S = tokens.shape[0]
    vocab, _ = emb_w.shape
    hidden = h0.shape[-1]
    out_size = dec_w.shape[0]
    num_layers = len(lstm_params)

    tok2d = tokens.reshape(S, 1).astype(jnp.int32)
    inputs = [tok2d, emb_w, h0, c0]
    for (w_ih, w_hh, b_ih, b_hh) in lstm_params:
        inputs += [w_ih.T, w_hh.T, b_ih.reshape(1, -1), b_hh.reshape(1, -1)]
    inputs += [dec_w.T, dec_b.reshape(1, -1)]

    kernel = functools.partial(_lstm_lm_kernel, num_layers, S, vocab, hidden,
                               out_size)
    vmem = lambda: pl.BlockSpec(memory_space=pltpu.MemorySpace.VMEM)

    return pl.pallas_call(
        kernel,
        out_shape=(
            jax.ShapeDtypeStruct((S, out_size), jnp.float32),
            jax.ShapeDtypeStruct((num_layers, 1, hidden), jnp.float32),
            jax.ShapeDtypeStruct((num_layers, 1, hidden), jnp.float32),
        ),
        in_specs=[vmem() for _ in inputs],
        out_specs=(vmem(), vmem(), vmem()),
    )(*inputs)


def rnn_forward_ref(tokens, emb_w, lstm_params, dec_w, dec_b, h0, c0):
    """Pure-JAX reference with torch.nn.LSTM semantics (gate order i,f,g,o)."""
    H = h0.shape[-1]
    x = emb_w[tokens]                                            # (S, E)
    hs, cs = [], []
    for l, (w_ih, w_hh, b_ih, b_hh) in enumerate(lstm_params):
        h, c = h0[l, 0], c0[l, 0]
        outs = []
        for t in range(x.shape[0]):
            g = x[t] @ w_ih.T + b_ih + h @ w_hh.T + b_hh
            i_g = jax.nn.sigmoid(g[0 * H:1 * H])
            f_g = jax.nn.sigmoid(g[1 * H:2 * H])
            g_g = jnp.tanh(g[2 * H:3 * H])
            o_g = jax.nn.sigmoid(g[3 * H:4 * H])
            c = f_g * c + i_g * g_g
            h = o_g * jnp.tanh(c)
            outs.append(h)
        x = jnp.stack(outs)
        hs.append(h)
        cs.append(c)
    out = x @ dec_w.T + dec_b
    return out, jnp.stack(hs)[:, None, :], jnp.stack(cs)[:, None, :]


if __name__ == "__main__":
    INPUT_SIZE = 32     # vocab size == embedding dim (nn.Embedding(input_size, input_size))
    HIDDEN_SIZE = 32    # 4H = 128 = one MXU tile width per recurrent step
    OUTPUT_SIZE = 32
    NUM_LAYERS = 2
    SEQ_LEN = 8

    key = jax.random.PRNGKey(0)
    keys = iter(jax.random.split(key, 24))
    scale = 1.0 / float(jnp.sqrt(HIDDEN_SIZE))

    emb_w = jax.random.normal(next(keys), (INPUT_SIZE, INPUT_SIZE), jnp.float32)
    lstm_params = []
    for l in range(NUM_LAYERS):
        in_l = INPUT_SIZE if l == 0 else HIDDEN_SIZE
        w_ih = jax.random.uniform(next(keys), (4 * HIDDEN_SIZE, in_l),
                                  jnp.float32, -scale, scale)
        w_hh = jax.random.uniform(next(keys), (4 * HIDDEN_SIZE, HIDDEN_SIZE),
                                  jnp.float32, -scale, scale)
        b_ih = jax.random.uniform(next(keys), (4 * HIDDEN_SIZE,),
                                  jnp.float32, -scale, scale)
        b_hh = jax.random.uniform(next(keys), (4 * HIDDEN_SIZE,),
                                  jnp.float32, -scale, scale)
        lstm_params.append((w_ih, w_hh, b_ih, b_hh))
    dec_w = jax.random.uniform(next(keys), (OUTPUT_SIZE, HIDDEN_SIZE),
                               jnp.float32, -scale, scale)
    dec_b = jax.random.uniform(next(keys), (OUTPUT_SIZE,),
                               jnp.float32, -scale, scale)

    input_seq = jax.random.randint(next(keys), (SEQ_LEN,), 0, INPUT_SIZE,
                                   jnp.int32)
    h0 = jnp.zeros((NUM_LAYERS, 1, HIDDEN_SIZE), jnp.float32)
    c0 = jnp.zeros((NUM_LAYERS, 1, HIDDEN_SIZE), jnp.float32)

    out, hn, cn = rnn_forward(input_seq, emb_w, lstm_params, dec_w, dec_b,
                              h0, c0)
    jax.block_until_ready((out, hn, cn))

    ref_out, ref_hn, ref_cn = rnn_forward_ref(input_seq, emb_w, lstm_params,
                                              dec_w, dec_b, h0, c0)
    assert out.shape == (SEQ_LEN, OUTPUT_SIZE)
    assert hn.shape == (NUM_LAYERS, 1, HIDDEN_SIZE)
    assert jnp.allclose(out, ref_out, atol=1e-2, rtol=1e-2)
    assert jnp.allclose(hn, ref_hn, atol=1e-2, rtol=1e-2)
    assert jnp.allclose(cn, ref_cn, atol=1e-2, rtol=1e-2)

    # TODO(synk): self.loss_fn (CrossEntropyLoss) is never used in forward();
    # .detach() on the returned hidden state is a no-op in JAX.
    print("KERNEL_OK")
</pallas_src>

<mosaic_0001>
module attributes {stable_mosaic.version = 11 : i64} {
  func.func @_lstm_lm_kernel(%arg0: memref<8x1xi32, #tpu.memory_space<vmem>>, %arg1: memref<32x32xf32, #tpu.memory_space<vmem>>, %arg2: memref<2x1x32xf32, #tpu.memory_space<vmem>>, %arg3: memref<2x1x32xf32, #tpu.memory_space<vmem>>, %arg4: memref<32x128xf32, #tpu.memory_space<vmem>>, %arg5: memref<32x128xf32, #tpu.memory_space<vmem>>, %arg6: memref<1x128xf32, #tpu.memory_space<vmem>>, %arg7: memref<1x128xf32, #tpu.memory_space<vmem>>, %arg8: memref<32x128xf32, #tpu.memory_space<vmem>>, %arg9: memref<32x128xf32, #tpu.memory_space<vmem>>, %arg10: memref<1x128xf32, #tpu.memory_space<vmem>>, %arg11: memref<1x128xf32, #tpu.memory_space<vmem>>, %arg12: memref<32x32xf32, #tpu.memory_space<vmem>>, %arg13: memref<1x32xf32, #tpu.memory_space<vmem>>, %arg14: memref<8x32xf32, #tpu.memory_space<vmem>>, %arg15: memref<2x1x32xf32, #tpu.memory_space<vmem>>, %arg16: memref<2x1x32xf32, #tpu.memory_space<vmem>>) attributes {dimension_semantics = [], scalar_prefetch = 0 : i64, scratch_operands = 0 : i64, tpu.core_type = #tpu.core_type<tc>} {
    %c0 = arith.constant 0 : index
    %c0_0 = arith.constant 0 : index
    %0 = vector.load %arg0[%c0, %c0_0] : memref<8x1xi32, #tpu.memory_space<vmem>>, vector<8x1xi32>
    %1 = tpu.iota {dimensions = array<i32: 1>} : vector<8x32xi32>
    %2 = vector.broadcast %0 : vector<8x1xi32> to vector<8x32xi32>
    %3 = arith.cmpi eq, %2, %1 : vector<8x32xi32>
    %4 = arith.extui %3 : vector<8x32xi1> to vector<8x32xi32>
    %5 = arith.sitofp %4 : vector<8x32xi32> to vector<8x32xf32>
    %c0_1 = arith.constant 0 : index
    %c0_2 = arith.constant 0 : index
    %6 = vector.load %arg1[%c0_1, %c0_2] : memref<32x32xf32, #tpu.memory_space<vmem>>, vector<32x32xf32>
    %cst = arith.constant dense<0.000000e+00> : vector<8x32xf32>
    %7 = tpu.matmul %5, %6, %cst {dimension_numbers = #tpu.dot_dimension_numbers<[1], [0], [0], [1], [0, 0, 1, 1], [], []>} : vector<8x32xf32>, vector<32x32xf32>, vector<8x32xf32> -> vector<8x32xf32>
    %c0_3 = arith.constant 0 : index
    %c0_4 = arith.constant 0 : index
    %8 = vector.load %arg5[%c0_3, %c0_4] : memref<32x128xf32, #tpu.memory_space<vmem>>, vector<32x128xf32>
    %c0_5 = arith.constant 0 : index
    %c0_6 = arith.constant 0 : index
    %9 = vector.load %arg6[%c0_5, %c0_6] : memref<1x128xf32, #tpu.memory_space<vmem>>, vector<1x128xf32>
    %c0_7 = arith.constant 0 : index
    %c0_8 = arith.constant 0 : index
    %10 = vector.load %arg7[%c0_7, %c0_8] : memref<1x128xf32, #tpu.memory_space<vmem>>, vector<1x128xf32>
    %11 = arith.addf %9, %10 : vector<1x128xf32>
    %c0_9 = arith.constant 0 : index
    %c0_10 = arith.constant 0 : index
    %12 = vector.load %arg4[%c0_9, %c0_10] : memref<32x128xf32, #tpu.memory_space<vmem>>, vector<32x128xf32>
    %cst_11 = arith.constant dense<0.000000e+00> : vector<8x128xf32>
    %13 = tpu.matmul %7, %12, %cst_11 {dimension_numbers = #tpu.dot_dimension_numbers<[1], [0], [0], [1], [0, 0, 1, 1], [], []>} : vector<8x32xf32>, vector<32x128xf32>, vector<8x128xf32> -> vector<8x128xf32>
    %14 = vector.broadcast %11 : vector<1x128xf32> to vector<8x128xf32>
    %15 = arith.addf %13, %14 : vector<8x128xf32>
    %c0_12 = arith.constant 0 : index
    %c0_13 = arith.constant 0 : index
    %c0_14 = arith.constant 0 : index
    %16 = vector.load %arg2[%c0_12, %c0_13, %c0_14] : memref<2x1x32xf32, #tpu.memory_space<vmem>>, vector<1x1x32xf32>
    %17 = vector.shape_cast %16 : vector<1x1x32xf32> to vector<1x32xf32>
    %c0_15 = arith.constant 0 : index
    %c0_16 = arith.constant 0 : index
    %c0_17 = arith.constant 0 : index
    %18 = vector.load %arg3[%c0_15, %c0_16, %c0_17] : memref<2x1x32xf32, #tpu.memory_space<vmem>>, vector<1x1x32xf32>
    %19 = vector.shape_cast %18 : vector<1x1x32xf32> to vector<1x32xf32>
    %20 = vector.extract_strided_slice %15 {offsets = [0, 0], sizes = [1, 128], strides = [1, 1]} : vector<8x128xf32> to vector<1x128xf32>
    %cst_18 = arith.constant dense<0.000000e+00> : vector<1x128xf32>
    %21 = tpu.matmul %17, %8, %cst_18 {dimension_numbers = #tpu.dot_dimension_numbers<[1], [0], [0], [1], [0, 0, 1, 1], [], []>} : vector<1x32xf32>, vector<32x128xf32>, vector<1x128xf32> -> vector<1x128xf32>
    %22 = arith.addf %20, %21 : vector<1x128xf32>
    %23 = vector.extract_strided_slice %22 {offsets = [0, 0], sizes = [1, 32], strides = [1, 1]} : vector<1x128xf32> to vector<1x32xf32>
    %24 = arith.negf %23 : vector<1x32xf32>
    %25 = math.exp %24 : vector<1x32xf32>
    %cst_19 = arith.constant 1.000000e+00 : f32
    %26 = vector.broadcast %cst_19 : f32 to vector<1x32xf32>
    %27 = arith.addf %26, %25 : vector<1x32xf32>
    %28 = arith.divf %26, %27 : vector<1x32xf32>
    %29 = vector.extract_strided_slice %22 {offsets = [0, 32], sizes = [1, 32], strides = [1, 1]} : vector<1x128xf32> to vector<1x32xf32>
    %30 = arith.negf %29 : vector<1x32xf32>
    %31 = math.exp %30 : vector<1x32xf32>
    %cst_20 = arith.constant 1.000000e+00 : f32
    %32 = vector.broadcast %cst_20 : f32 to vector<1x32xf32>
    %33 = arith.addf %32, %31 : vector<1x32xf32>
    %34 = arith.divf %32, %33 : vector<1x32xf32>
    %35 = vector.extract_strided_slice %22 {offsets = [0, 64], sizes = [1, 32], strides = [1, 1]} : vector<1x128xf32> to vector<1x32xf32>
    %36 = math.tanh %35 : vector<1x32xf32>
    %37 = vector.extract_strided_slice %22 {offsets = [0, 96], sizes = [1, 32], strides = [1, 1]} : vector<1x128xf32> to vector<1x32xf32>
    %38 = arith.negf %37 : vector<1x32xf32>
    %39 = math.exp %38 : vector<1x32xf32>
    %cst_21 = arith.constant 1.000000e+00 : f32
    %40 = vector.broadcast %cst_21 : f32 to vector<1x32xf32>
    %41 = arith.addf %40, %39 : vector<1x32xf32>
    %42 = arith.divf %40, %41 : vector<1x32xf32>
    %43 = arith.mulf %34, %19 : vector<1x32xf32>
    %44 = arith.mulf %28, %36 : vector<1x32xf32>
    %45 = arith.addf %43, %44 : vector<1x32xf32>
    %46 = math.tanh %45 : vector<1x32xf32>
    %47 = arith.mulf %42, %46 : vector<1x32xf32>
    %48 = vector.extract_strided_slice %15 {offsets = [1, 0], sizes = [1, 128], strides = [1, 1]} : vector<8x128xf32> to vector<1x128xf32>
    %cst_22 = arith.constant dense<0.000000e+00> : vector<1x128xf32>
    %49 = tpu.matmul %47, %8, %cst_22 {dimension_numbers = #tpu.dot_dimension_numbers<[1], [0], [0], [1], [0, 0, 1, 1], [], []>} : vector<1x32xf32>, vector<32x128xf32>, vector<1x128xf32> -> vector<1x128xf32>
    %50 = arith.addf %48, %49 : vector<1x128xf32>
    %51 = vector.extract_strided_slice %50 {offsets = [0, 0], sizes = [1, 32], strides = [1, 1]} : vector<1x128xf32> to vector<1x32xf32>
    %52 = arith.negf %51 : vector<1x32xf32>
    %53 = math.exp %52 : vector<1x32xf32>
    %cst_23 = arith.constant 1.000000e+00 : f32
    %54 = vector.broadcast %cst_23 : f32 to vector<1x32xf32>
    %55 = arith.addf %54, %53 : vector<1x32xf32>
    %56 = arith.divf %54, %55 : vector<1x32xf32>
    %57 = vector.extract_strided_slice %50 {offsets = [0, 32], sizes = [1, 32], strides = [1, 1]} : vector<1x128xf32> to vector<1x32xf32>
    %58 = arith.negf %57 : vector<1x32xf32>
    %59 = math.exp %58 : vector<1x32xf32>
    %cst_24 = arith.constant 1.000000e+00 : f32
    %60 = vector.broadcast %cst_24 : f32 to vector<1x32xf32>
    %61 = arith.addf %60, %59 : vector<1x32xf32>
    %62 = arith.divf %60, %61 : vector<1x32xf32>
    %63 = vector.extract_strided_slice %50 {offsets = [0, 64], sizes = [1, 32], strides = [1, 1]} : vector<1x128xf32> to vector<1x32xf32>
    %64 = math.tanh %63 : vector<1x32xf32>
    %65 = vector.extract_strided_slice %50 {offsets = [0, 96], sizes = [1, 32], strides = [1, 1]} : vector<1x128xf32> to vector<1x32xf32>
    %66 = arith.negf %65 : vector<1x32xf32>
    %67 = math.exp %66 : vector<1x32xf32>
    %cst_25 = arith.constant 1.000000e+00 : f32
    %68 = vector.broadcast %cst_25 : f32 to vector<1x32xf32>
    %69 = arith.addf %68, %67 : vector<1x32xf32>
    %70 = arith.divf %68, %69 : vector<1x32xf32>
    %71 = arith.mulf %62, %45 : vector<1x32xf32>
    %72 = arith.mulf %56, %64 : vector<1x32xf32>
    %73 = arith.addf %71, %72 : vector<1x32xf32>
    %74 = math.tanh %73 : vector<1x32xf32>
    %75 = arith.mulf %70, %74 : vector<1x32xf32>
    %76 = vector.extract_strided_slice %15 {offsets = [2, 0], sizes = [1, 128], strides = [1, 1]} : vector<8x128xf32> to vector<1x128xf32>
    %cst_26 = arith.constant dense<0.000000e+00> : vector<1x128xf32>
    %77 = tpu.matmul %75, %8, %cst_26 {dimension_numbers = #tpu.dot_dimension_numbers<[1], [0], [0], [1], [0, 0, 1, 1], [], []>} : vector<1x32xf32>, vector<32x128xf32>, vector<1x128xf32> -> vector<1x128xf32>
    %78 = arith.addf %76, %77 : vector<1x128xf32>
    %79 = vector.extract_strided_slice %78 {offsets = [0, 0], sizes = [1, 32], strides = [1, 1]} : vector<1x128xf32> to vector<1x32xf32>
    %80 = arith.negf %79 : vector<1x32xf32>
    %81 = math.exp %80 : vector<1x32xf32>
    %cst_27 = arith.constant 1.000000e+00 : f32
    %82 = vector.broadcast %cst_27 : f32 to vector<1x32xf32>
    %83 = arith.addf %82, %81 : vector<1x32xf32>
    %84 = arith.divf %82, %83 : vector<1x32xf32>
    %85 = vector.extract_strided_slice %78 {offsets = [0, 32], sizes = [1, 32], strides = [1, 1]} : vector<1x128xf32> to vector<1x32xf32>
    %86 = arith.negf %85 : vector<1x32xf32>
    %87 = math.exp %86 : vector<1x32xf32>
    %cst_28 = arith.constant 1.000000e+00 : f32
    %88 = vector.broadcast %cst_28 : f32 to vector<1x32xf32>
    %89 = arith.addf %88, %87 : vector<1x32xf32>
    %90 = arith.divf %88, %89 : vector<1x32xf32>
    %91 = vector.extract_strided_slice %78 {offsets = [0, 64], sizes = [1, 32], strides = [1, 1]} : vector<1x128xf32> to vector<1x32xf32>
    %92 = math.tanh %91 : vector<1x32xf32>
    %93 = vector.extract_strided_slice %78 {offsets = [0, 96], sizes = [1, 32], strides = [1, 1]} : vector<1x128xf32> to vector<1x32xf32>
    %94 = arith.negf %93 : vector<1x32xf32>
    %95 = math.exp %94 : vector<1x32xf32>
    %cst_29 = arith.constant 1.000000e+00 : f32
    %96 = vector.broadcast %cst_29 : f32 to vector<1x32xf32>
    %97 = arith.addf %96, %95 : vector<1x32xf32>
    %98 = arith.divf %96, %97 : vector<1x32xf32>
    %99 = arith.mulf %90, %73 : vector<1x32xf32>
    %100 = arith.mulf %84, %92 : vector<1x32xf32>
    %101 = arith.addf %99, %100 : vector<1x32xf32>
    %102 = math.tanh %101 : vector<1x32xf32>
    %103 = arith.mulf %98, %102 : vector<1x32xf32>
    %104 = vector.extract_strided_slice %15 {offsets = [3, 0], sizes = [1, 128], strides = [1, 1]} : vector<8x128xf32> to vector<1x128xf32>
    %cst_30 = arith.constant dense<0.000000e+00> : vector<1x128xf32>
    %105 = tpu.matmul %103, %8, %cst_30 {dimension_numbers = #tpu.dot_dimension_numbers<[1], [0], [0], [1], [0, 0, 1, 1], [], []>} : vector<1x32xf32>, vector<32x128xf32>, vector<1x128xf32> -> vector<1x128xf32>
    %106 = arith.addf %104, %105 : vector<1x128xf32>
    %107 = vector.extract_strided_slice %106 {offsets = [0, 0], sizes = [1, 32], strides = [1, 1]} : vector<1x128xf32> to vector<1x32xf32>
    %108 = arith.negf %107 : vector<1x32xf32>
    %109 = math.exp %108 : vector<1x32xf32>
    %cst_31 = arith.constant 1.000000e+00 : f32
    %110 = vector.broadcast %cst_31 : f32 to vector<1x32xf32>
    %111 = arith.addf %110, %109 : vector<1x32xf32>
    %112 = arith.divf %110, %111 : vector<1x32xf32>
    %113 = vector.extract_strided_slice %106 {offsets = [0, 32], sizes = [1, 32], strides = [1, 1]} : vector<1x128xf32> to vector<1x32xf32>
    %114 = arith.negf %113 : vector<1x32xf32>
    %115 = math.exp %114 : vector<1x32xf32>
    %cst_32 = arith.constant 1.000000e+00 : f32
    %116 = vector.broadcast %cst_32 : f32 to vector<1x32xf32>
    %117 = arith.addf %116, %115 : vector<1x32xf32>
    %118 = arith.divf %116, %117 : vector<1x32xf32>
    %119 = vector.extract_strided_slice %106 {offsets = [0, 64], sizes = [1, 32], strides = [1, 1]} : vector<1x128xf32> to vector<1x32xf32>
    %120 = math.tanh %119 : vector<1x32xf32>
    %121 = vector.extract_strided_slice %106 {offsets = [0, 96], sizes = [1, 32], strides = [1, 1]} : vector<1x128xf32> to vector<1x32xf32>
    %122 = arith.negf %121 : vector<1x32xf32>
    %123 = math.exp %122 : vector<1x32xf32>
    %cst_33 = arith.constant 1.000000e+00 : f32
    %124 = vector.broadcast %cst_33 : f32 to vector<1x32xf32>
    %125 = arith.addf %124, %123 : vector<1x32xf32>
    %126 = arith.divf %124, %125 : vector<1x32xf32>
    %127 = arith.mulf %118, %101 : vector<1x32xf32>
    %128 = arith.mulf %112, %120 : vector<1x32xf32>
    %129 = arith.addf %127, %128 : vector<1x32xf32>
    %130 = math.tanh %129 : vector<1x32xf32>
    %131 = arith.mulf %126, %130 : vector<1x32xf32>
    %132 = vector.extract_strided_slice %15 {offsets = [4, 0], sizes = [1, 128], strides = [1, 1]} : vector<8x128xf32> to vector<1x128xf32>
    %cst_34 = arith.constant dense<0.000000e+00> : vector<1x128xf32>
    %133 = tpu.matmul %131, %8, %cst_34 {dimension_numbers = #tpu.dot_dimension_numbers<[1], [0], [0], [1], [0, 0, 1, 1], [], []>} : vector<1x32xf32>, vector<32x128xf32>, vector<1x128xf32> -> vector<1x128xf32>
    %134 = arith.addf %132, %133 : vector<1x128xf32>
    %135 = vector.extract_strided_slice %134 {offsets = [0, 0], sizes = [1, 32], strides = [1, 1]} : vector<1x128xf32> to vector<1x32xf32>
    %136 = arith.negf %135 : vector<1x32xf32>
    %137 = math.exp %136 : vector<1x32xf32>
    %cst_35 = arith.constant 1.000000e+00 : f32
    %138 = vector.broadcast %cst_35 : f32 to vector<1x32xf32>
    %139 = arith.addf %138, %137 : vector<1x32xf32>
    %140 = arith.divf %138, %139 : vector<1x32xf32>
    %141 = vector.extract_strided_slice %134 {offsets = [0, 32], sizes = [1, 32], strides = [1, 1]} : vector<1x128xf32> to vector<1x32xf32>
    %142 = arith.negf %141 : vector<1x32xf32>
    %143 = math.exp %142 : vector<1x32xf32>
    %cst_36 = arith.constant 1.000000e+00 : f32
    %144 = vector.broadcast %cst_36 : f32 to vector<1x32xf32>
    %145 = arith.addf %144, %143 : vector<1x32xf32>
    %146 = arith.divf %144, %145 : vector<1x32xf32>
    %147 = vector.extract_strided_slice %134 {offsets = [0, 64], sizes = [1, 32], strides = [1, 1]} : vector<1x128xf32> to vector<1x32xf32>
    %148 = math.tanh %147 : vector<1x32xf32>
    %149 = vector.extract_strided_slice %134 {offsets = [0, 96], sizes = [1, 32], strides = [1, 1]} : vector<1x128xf32> to vector<1x32xf32>
    %150 = arith.negf %149 : vector<1x32xf32>
    %151 = math.exp %150 : vector<1x32xf32>
    %cst_37 = arith.constant 1.000000e+00 : f32
    %152 = vector.broadcast %cst_37 : f32 to vector<1x32xf32>
    %153 = arith.addf %152, %151 : vector<1x32xf32>
    %154 = arith.divf %152, %153 : vector<1x32xf32>
    %155 = arith.mulf %146, %129 : vector<1x32xf32>
    %156 = arith.mulf %140, %148 : vector<1x32xf32>
    %157 = arith.addf %155, %156 : vector<1x32xf32>
    %158 = math.tanh %157 : vector<1x32xf32>
    %159 = arith.mulf %154, %158 : vector<1x32xf32>
    %160 = vector.extract_strided_slice %15 {offsets = [5, 0], sizes = [1, 128], strides = [1, 1]} : vector<8x128xf32> to vector<1x128xf32>
    %cst_38 = arith.constant dense<0.000000e+00> : vector<1x128xf32>
    %161 = tpu.matmul %159, %8, %cst_38 {dimension_numbers = #tpu.dot_dimension_numbers<[1], [0], [0], [1], [0, 0, 1, 1], [], []>} : vector<1x32xf32>, vector<32x128xf32>, vector<1x128xf32> -> vector<1x128xf32>
    %162 = arith.addf %160, %161 : vector<1x128xf32>
    %163 = vector.extract_strided_slice %162 {offsets = [0, 0], sizes = [1, 32], strides = [1, 1]} : vector<1x128xf32> to vector<1x32xf32>
    %164 = arith.negf %163 : vector<1x32xf32>
    %165 = math.exp %164 : vector<1x32xf32>
    %cst_39 = arith.constant 1.000000e+00 : f32
    %166 = vector.broadcast %cst_39 : f32 to vector<1x32xf32>
    %167 = arith.addf %166, %165 : vector<1x32xf32>
    %168 = arith.divf %166, %167 : vector<1x32xf32>
    %169 = vector.extract_strided_slice %162 {offsets = [0, 32], sizes = [1, 32], strides = [1, 1]} : vector<1x128xf32> to vector<1x32xf32>
    %170 = arith.negf %169 : vector<1x32xf32>
    %171 = math.exp %170 : vector<1x32xf32>
    %cst_40 = arith.constant 1.000000e+00 : f32
    %172 = vector.broadcast %cst_40 : f32 to vector<1x32xf32>
    %173 = arith.addf %172, %171 : vector<1x32xf32>
    %174 = arith.divf %172, %173 : vector<1x32xf32>
    %175 = vector.extract_strided_slice %162 {offsets = [0, 64], sizes = [1, 32], strides = [1, 1]} : vector<1x128xf32> to vector<1x32xf32>
    %176 = math.tanh %175 : vector<1x32xf32>
    %177 = vector.extract_strided_slice %162 {offsets = [0, 96], sizes = [1, 32], strides = [1, 1]} : vector<1x128xf32> to vector<1x32xf32>
    %178 = arith.negf %177 : vector<1x32xf32>
    %179 = math.exp %178 : vector<1x32xf32>
    %cst_41 = arith.constant 1.000000e+00 : f32
    %180 = vector.broadcast %cst_41 : f32 to vector<1x32xf32>
    %181 = arith.addf %180, %179 : vector<1x32xf32>
    %182 = arith.divf %180, %181 : vector<1x32xf32>
    %183 = arith.mulf %174, %157 : vector<1x32xf32>
    %184 = arith.mulf %168, %176 : vector<1x32xf32>
    %185 = arith.addf %183, %184 : vector<1x32xf32>
    %186 = math.tanh %185 : vector<1x32xf32>
    %187 = arith.mulf %182, %186 : vector<1x32xf32>
    %188 = vector.extract_strided_slice %15 {offsets = [6, 0], sizes = [1, 128], strides = [1, 1]} : vector<8x128xf32> to vector<1x128xf32>
    %cst_42 = arith.constant dense<0.000000e+00> : vector<1x128xf32>
    %189 = tpu.matmul %187, %8, %cst_42 {dimension_numbers = #tpu.dot_dimension_numbers<[1], [0], [0], [1], [0, 0, 1, 1], [], []>} : vector<1x32xf32>, vector<32x128xf32>, vector<1x128xf32> -> vector<1x128xf32>
    %190 = arith.addf %188, %189 : vector<1x128xf32>
    %191 = vector.extract_strided_slice %190 {offsets = [0, 0], sizes = [1, 32], strides = [1, 1]} : vector<1x128xf32> to vector<1x32xf32>
    %192 = arith.negf %191 : vector<1x32xf32>
    %193 = math.exp %192 : vector<1x32xf32>
    %cst_43 = arith.constant 1.000000e+00 : f32
    %194 = vector.broadcast %cst_43 : f32 to vector<1x32xf32>
    %195 = arith.addf %194, %193 : vector<1x32xf32>
    %196 = arith.divf %194, %195 : vector<1x32xf32>
    %197 = vector.extract_strided_slice %190 {offsets = [0, 32], sizes = [1, 32], strides = [1, 1]} : vector<1x128xf32> to vector<1x32xf32>
    %198 = arith.negf %197 : vector<1x32xf32>
    %199 = math.exp %198 : vector<1x32xf32>
    %cst_44 = arith.constant 1.000000e+00 : f32
    %200 = vector.broadcast %cst_44 : f32 to vector<1x32xf32>
    %201 = arith.addf %200, %199 : vector<1x32xf32>
    %202 = arith.divf %200, %201 : vector<1x32xf32>
    %203 = vector.extract_strided_slice %190 {offsets = [0, 64], sizes = [1, 32], strides = [1, 1]} : vector<1x128xf32> to vector<1x32xf32>
    %204 = math.tanh %203 : vector<1x32xf32>
    %205 = vector.extract_strided_slice %190 {offsets = [0, 96], sizes = [1, 32], strides = [1, 1]} : vector<1x128xf32> to vector<1x32xf32>
    %206 = arith.negf %205 : vector<1x32xf32>
    %207 = math.exp %206 : vector<1x32xf32>
    %cst_45 = arith.constant 1.000000e+00 : f32
    %208 = vector.broadcast %cst_45 : f32 to vector<1x32xf32>
    %209 = arith.addf %208, %207 : vector<1x32xf32>
    %210 = arith.divf %208, %209 : vector<1x32xf32>
    %211 = arith.mulf %202, %185 : vector<1x32xf32>
    %212 = arith.mulf %196, %204 : vector<1x32xf32>
    %213 = arith.addf %211, %212 : vector<1x32xf32>
    %214 = math.tanh %213 : vector<1x32xf32>
    %215 = arith.mulf %210, %214 : vector<1x32xf32>
    %216 = vector.extract_strided_slice %15 {offsets = [7, 0], sizes = [1, 128], strides = [1, 1]} : vector<8x128xf32> to vector<1x128xf32>
    %cst_46 = arith.constant dense<0.000000e+00> : vector<1x128xf32>
    %217 = tpu.matmul %215, %8, %cst_46 {dimension_numbers = #tpu.dot_dimension_numbers<[1], [0], [0], [1], [0, 0, 1, 1], [], []>} : vector<1x32xf32>, vector<32x128xf32>, vector<1x128xf32> -> vector<1x128xf32>
    %218 = arith.addf %216, %217 : vector<1x128xf32>
    %219 = vector.extract_strided_slice %218 {offsets = [0, 0], sizes = [1, 32], strides = [1, 1]} : vector<1x128xf32> to vector<1x32xf32>
    %220 = arith.negf %219 : vector<1x32xf32>
    %221 = math.exp %220 : vector<1x32xf32>
    %cst_47 = arith.constant 1.000000e+00 : f32
    %222 = vector.broadcast %cst_47 : f32 to vector<1x32xf32>
    %223 = arith.addf %222, %221 : vector<1x32xf32>
    %224 = arith.divf %222, %223 : vector<1x32xf32>
    %225 = vector.extract_strided_slice %218 {offsets = [0, 32], sizes = [1, 32], strides = [1, 1]} : vector<1x128xf32> to vector<1x32xf32>
    %226 = arith.negf %225 : vector<1x32xf32>
    %227 = math.exp %226 : vector<1x32xf32>
    %cst_48 = arith.constant 1.000000e+00 : f32
    %228 = vector.broadcast %cst_48 : f32 to vector<1x32xf32>
    %229 = arith.addf %228, %227 : vector<1x32xf32>
    %230 = arith.divf %228, %229 : vector<1x32xf32>
    %231 = vector.extract_strided_slice %218 {offsets = [0, 64], sizes = [1, 32], strides = [1, 1]} : vector<1x128xf32> to vector<1x32xf32>
    %232 = math.tanh %231 : vector<1x32xf32>
    %233 = vector.extract_strided_slice %218 {offsets = [0, 96], sizes = [1, 32], strides = [1, 1]} : vector<1x128xf32> to vector<1x32xf32>
    %234 = arith.negf %233 : vector<1x32xf32>
    %235 = math.exp %234 : vector<1x32xf32>
    %cst_49 = arith.constant 1.000000e+00 : f32
    %236 = vector.broadcast %cst_49 : f32 to vector<1x32xf32>
    %237 = arith.addf %236, %235 : vector<1x32xf32>
    %238 = arith.divf %236, %237 : vector<1x32xf32>
    %239 = arith.mulf %230, %213 : vector<1x32xf32>
    %240 = arith.mulf %224, %232 : vector<1x32xf32>
    %241 = arith.addf %239, %240 : vector<1x32xf32>
    %242 = math.tanh %241 : vector<1x32xf32>
    %243 = arith.mulf %238, %242 : vector<1x32xf32>
    %c0_50 = arith.constant 0 : index
    %c0_51 = arith.constant 0 : index
    %c0_52 = arith.constant 0 : index
    %244 = vector.load %arg15[%c0_50, %c0_51, %c0_52] : memref<2x1x32xf32, #tpu.memory_space<vmem>>, vector<1x1x32xf32>
    %245 = vector.shape_cast %244 : vector<1x1x32xf32> to vector<1x32xf32>
    %246 = vector.shape_cast %243 : vector<1x32xf32> to vector<1x1x32xf32>
    tpu.vector_store %arg15[%c0_50, %c0_51, %c0_52], %246 {strides = array<i32>} : memref<2x1x32xf32, #tpu.memory_space<vmem>>, vector<1x1x32xf32>,
    %c0_53 = arith.constant 0 : index
    %c0_54 = arith.constant 0 : index
    %c0_55 = arith.constant 0 : index
    %247 = vector.load %arg16[%c0_53, %c0_54, %c0_55] : memref<2x1x32xf32, #tpu.memory_space<vmem>>, vector<1x1x32xf32>
    %248 = vector.shape_cast %247 : vector<1x1x32xf32> to vector<1x32xf32>
    %249 = vector.shape_cast %241 : vector<1x32xf32> to vector<1x1x32xf32>
    tpu.vector_store %arg16[%c0_53, %c0_54, %c0_55], %249 {strides = array<i32>} : memref<2x1x32xf32, #tpu.memory_space<vmem>>, vector<1x1x32xf32>,
    %250 = tpu.concatenate %47, %75, %103, %131, %159, %187, %215, %243 in 0 : vector<1x32xf32>, vector<1x32xf32>, vector<1x32xf32>, vector<1x32xf32>, vector<1x32xf32>, vector<1x32xf32>, vector<1x32xf32>, vector<1x32xf32> -> vector<8x32xf32>
    %c0_56 = arith.constant 0 : index
    %c0_57 = arith.constant 0 : index
    %251 = vector.load %arg9[%c0_56, %c0_57] : memref<32x128xf32, #tpu.memory_space<vmem>>, vector<32x128xf32>
    %c0_58 = arith.constant 0 : index
    %c0_59 = arith.constant 0 : index
    %252 = vector.load %arg10[%c0_58, %c0_59] : memref<1x128xf32, #tpu.memory_space<vmem>>, vector<1x128xf32>
    %c0_60 = arith.constant 0 : index
    %c0_61 = arith.constant 0 : index
    %253 = vector.load %arg11[%c0_60, %c0_61] : memref<1x128xf32, #tpu.memory_space<vmem>>, vector<1x128xf32>
    %254 = arith.addf %252, %253 : vector<1x128xf32>
    %c0_62 = arith.constant 0 : index
    %c0_63 = arith.constant 0 : index
    %255 = vector.load %arg8[%c0_62, %c0_63] : memref<32x128xf32, #tpu.memory_space<vmem>>, vector<32x128xf32>
    %cst_64 = arith.constant dense<0.000000e+00> : vector<8x128xf32>
    %256 = tpu.matmul %250, %255, %cst_64 {dimension_numbers = #tpu.dot_dimension_numbers<[1], [0], [0], [1], [0, 0, 1, 1], [], []>} : vector<8x32xf32>, vector<32x128xf32>, vector<8x128xf32> -> vector<8x128xf32>
    %257 = vector.broadcast %254 : vector<1x128xf32> to vector<8x128xf32>
    %258 = arith.addf %256, %257 : vector<8x128xf32>
    %c1 = arith.constant 1 : index
    %c0_65 = arith.constant 0 : index
    %c0_66 = arith.constant 0 : index
    %259 = vector.load %arg2[%c1, %c0_65, %c0_66] : memref<2x1x32xf32, #tpu.memory_space<vmem>>, vector<1x1x32xf32>
    %260 = vector.shape_cast %259 : vector<1x1x32xf32> to vector<1x32xf32>
    %c1_67 = arith.constant 1 : index
    %c0_68 = arith.constant 0 : index
    %c0_69 = arith.constant 0 : index
    %261 = vector.load %arg3[%c1_67, %c0_68, %c0_69] : memref<2x1x32xf32, #tpu.memory_space<vmem>>, vector<1x1x32xf32>
    %262 = vector.shape_cast %261 : vector<1x1x32xf32> to vector<1x32xf32>
    %263 = vector.extract_strided_slice %258 {offsets = [0, 0], sizes = [1, 128], strides = [1, 1]} : vector<8x128xf32> to vector<1x128xf32>
    %cst_70 = arith.constant dense<0.000000e+00> : vector<1x128xf32>
    %264 = tpu.matmul %260, %251, %cst_70 {dimension_numbers = #tpu.dot_dimension_numbers<[1], [0], [0], [1], [0, 0, 1, 1], [], []>} : vector<1x32xf32>, vector<32x128xf32>, vector<1x128xf32> -> vector<1x128xf32>
    %265 = arith.addf %263, %264 : vector<1x128xf32>
    %266 = vector.extract_strided_slice %265 {offsets = [0, 0], sizes = [1, 32], strides = [1, 1]} : vector<1x128xf32> to vector<1x32xf32>
    %267 = arith.negf %266 : vector<1x32xf32>
    %268 = math.exp %267 : vector<1x32xf32>
    %cst_71 = arith.constant 1.000000e+00 : f32
    %269 = vector.broadcast %cst_71 : f32 to vector<1x32xf32>
    %270 = arith.addf %269, %268 : vector<1x32xf32>
    %271 = arith.divf %269, %270 : vector<1x32xf32>
    %272 = vector.extract_strided_slice %265 {offsets = [0, 32], sizes = [1, 32], strides = [1, 1]} : vector<1x128xf32> to vector<1x32xf32>
    %273 = arith.negf %272 : vector<1x32xf32>
    %274 = math.exp %273 : vector<1x32xf32>
    %cst_72 = arith.constant 1.000000e+00 : f32
    %275 = vector.broadcast %cst_72 : f32 to vector<1x32xf32>
    %276 = arith.addf %275, %274 : vector<1x32xf32>
    %277 = arith.divf %275, %276 : vector<1x32xf32>
    %278 = vector.extract_strided_slice %265 {offsets = [0, 64], sizes = [1, 32], strides = [1, 1]} : vector<1x128xf32> to vector<1x32xf32>
    %279 = math.tanh %278 : vector<1x32xf32>
    %280 = vector.extract_strided_slice %265 {offsets = [0, 96], sizes = [1, 32], strides = [1, 1]} : vector<1x128xf32> to vector<1x32xf32>
    %281 = arith.negf %280 : vector<1x32xf32>
    %282 = math.exp %281 : vector<1x32xf32>
    %cst_73 = arith.constant 1.000000e+00 : f32
    %283 = vector.broadcast %cst_73 : f32 to vector<1x32xf32>
    %284 = arith.addf %283, %282 : vector<1x32xf32>
    %285 = arith.divf %283, %284 : vector<1x32xf32>
    %286 = arith.mulf %277, %262 : vector<1x32xf32>
    %287 = arith.mulf %271, %279 : vector<1x32xf32>
    %288 = arith.addf %286, %287 : vector<1x32xf32>
    %289 = math.tanh %288 : vector<1x32xf32>
    %290 = arith.mulf %285, %289 : vector<1x32xf32>
    %291 = vector.extract_strided_slice %258 {offsets = [1, 0], sizes = [1, 128], strides = [1, 1]} : vector<8x128xf32> to vector<1x128xf32>
    %cst_74 = arith.constant dense<0.000000e+00> : vector<1x128xf32>
    %292 = tpu.matmul %290, %251, %cst_74 {dimension_numbers = #tpu.dot_dimension_numbers<[1], [0], [0], [1], [0, 0, 1, 1], [], []>} : vector<1x32xf32>, vector<32x128xf32>, vector<1x128xf32> -> vector<1x128xf32>
    %293 = arith.addf %291, %292 : vector<1x128xf32>
    %294 = vector.extract_strided_slice %293 {offsets = [0, 0], sizes = [1, 32], strides = [1, 1]} : vector<1x128xf32> to vector<1x32xf32>
    %295 = arith.negf %294 : vector<1x32xf32>
    %296 = math.exp %295 : vector<1x32xf32>
    %cst_75 = arith.constant 1.000000e+00 : f32
    %297 = vector.broadcast %cst_75 : f32 to vector<1x32xf32>
    %298 = arith.addf %297, %296 : vector<1x32xf32>
    %299 = arith.divf %297, %298 : vector<1x32xf32>
    %300 = vector.extract_strided_slice %293 {offsets = [0, 32], sizes = [1, 32], strides = [1, 1]} : vector<1x128xf32> to vector<1x32xf32>
    %301 = arith.negf %300 : vector<1x32xf32>
    %302 = math.exp %301 : vector<1x32xf32>
    %cst_76 = arith.constant 1.000000e+00 : f32
    %303 = vector.broadcast %cst_76 : f32 to vector<1x32xf32>
    %304 = arith.addf %303, %302 : vector<1x32xf32>
    %305 = arith.divf %303, %304 : vector<1x32xf32>
    %306 = vector.extract_strided_slice %293 {offsets = [0, 64], sizes = [1, 32], strides = [1, 1]} : vector<1x128xf32> to vector<1x32xf32>
    %307 = math.tanh %306 : vector<1x32xf32>
    %308 = vector.extract_strided_slice %293 {offsets = [0, 96], sizes = [1, 32], strides = [1, 1]} : vector<1x128xf32> to vector<1x32xf32>
    %309 = arith.negf %308 : vector<1x32xf32>
    %310 = math.exp %309 : vector<1x32xf32>
    %cst_77 = arith.constant 1.000000e+00 : f32
    %311 = vector.broadcast %cst_77 : f32 to vector<1x32xf32>
    %312 = arith.addf %311, %310 : vector<1x32xf32>
    %313 = arith.divf %311, %312 : vector<1x32xf32>
    %314 = arith.mulf %305, %288 : vector<1x32xf32>
    %315 = arith.mulf %299, %307 : vector<1x32xf32>
    %316 = arith.addf %314, %315 : vector<1x32xf32>
    %317 = math.tanh %316 : vector<1x32xf32>
    %318 = arith.mulf %313, %317 : vector<1x32xf32>
    %319 = vector.extract_strided_slice %258 {offsets = [2, 0], sizes = [1, 128], strides = [1, 1]} : vector<8x128xf32> to vector<1x128xf32>
    %cst_78 = arith.constant dense<0.000000e+00> : vector<1x128xf32>
    %320 = tpu.matmul %318, %251, %cst_78 {dimension_numbers = #tpu.dot_dimension_numbers<[1], [0], [0], [1], [0, 0, 1, 1], [], []>} : vector<1x32xf32>, vector<32x128xf32>, vector<1x128xf32> -> vector<1x128xf32>
    %321 = arith.addf %319, %320 : vector<1x128xf32>
    %322 = vector.extract_strided_slice %321 {offsets = [0, 0], sizes = [1, 32], strides = [1, 1]} : vector<1x128xf32> to vector<1x32xf32>
    %323 = arith.negf %322 : vector<1x32xf32>
    %324 = math.exp %323 : vector<1x32xf32>
    %cst_79 = arith.constant 1.000000e+00 : f32
    %325 = vector.broadcast %cst_79 : f32 to vector<1x32xf32>
    %326 = arith.addf %325, %324 : vector<1x32xf32>
    %327 = arith.divf %325, %326 : vector<1x32xf32>
    %328 = vector.extract_strided_slice %321 {offsets = [0, 32], sizes = [1, 32], strides = [1, 1]} : vector<1x128xf32> to vector<1x32xf32>
    %329 = arith.negf %328 : vector<1x32xf32>
    %330 = math.exp %329 : vector<1x32xf32>
    %cst_80 = arith.constant 1.000000e+00 : f32
    %331 = vector.broadcast %cst_80 : f32 to vector<1x32xf32>
    %332 = arith.addf %331, %330 : vector<1x32xf32>
    %333 = arith.divf %331, %332 : vector<1x32xf32>
    %334 = vector.extract_strided_slice %321 {offsets = [0, 64], sizes = [1, 32], strides = [1, 1]} : vector<1x128xf32> to vector<1x32xf32>
    %335 = math.tanh %334 : vector<1x32xf32>
    %336 = vector.extract_strided_slice %321 {offsets = [0, 96], sizes = [1, 32], strides = [1, 1]} : vector<1x128xf32> to vector<1x32xf32>
    %337 = arith.negf %336 : vector<1x32xf32>
    %338 = math.exp %337 : vector<1x32xf32>
    %cst_81 = arith.constant 1.000000e+00 : f32
    %339 = vector.broadcast %cst_81 : f32 to vector<1x32xf32>
    %340 = arith.addf %339, %338 : vector<1x32xf32>
    %341 = arith.divf %339, %340 : vector<1x32xf32>
    %342 = arith.mulf %333, %316 : vector<1x32xf32>
    %343 = arith.mulf %327, %335 : vector<1x32xf32>
    %344 = arith.addf %342, %343 : vector<1x32xf32>
    %345 = math.tanh %344 : vector<1x32xf32>
    %346 = arith.mulf %341, %345 : vector<1x32xf32>
    %347 = vector.extract_strided_slice %258 {offsets = [3, 0], sizes = [1, 128], strides = [1, 1]} : vector<8x128xf32> to vector<1x128xf32>
    %cst_82 = arith.constant dense<0.000000e+00> : vector<1x128xf32>
    %348 = tpu.matmul %346, %251, %cst_82 {dimension_numbers = #tpu.dot_dimension_numbers<[1], [0], [0], [1], [0, 0, 1, 1], [], []>} : vector<1x32xf32>, vector<32x128xf32>, vector<1x128xf32> -> vector<1x128xf32>
    %349 = arith.addf %347, %348 : vector<1x128xf32>
    %350 = vector.extract_strided_slice %349 {offsets = [0, 0], sizes = [1, 32], strides = [1, 1]} : vector<1x128xf32> to vector<1x32xf32>
    %351 = arith.negf %350 : vector<1x32xf32>
    %352 = math.exp %351 : vector<1x32xf32>
    %cst_83 = arith.constant 1.000000e+00 : f32
    %353 = vector.broadcast %cst_83 : f32 to vector<1x32xf32>
    %354 = arith.addf %353, %352 : vector<1x32xf32>
    %355 = arith.divf %353, %354 : vector<1x32xf32>
    %356 = vector.extract_strided_slice %349 {offsets = [0, 32], sizes = [1, 32], strides = [1, 1]} : vector<1x128xf32> to vector<1x32xf32>
    %357 = arith.negf %356 : vector<1x32xf32>
    %358 = math.exp %357 : vector<1x32xf32>
    %cst_84 = arith.constant 1.000000e+00 : f32
    %359 = vector.broadcast %cst_84 : f32 to vector<1x32xf32>
    %360 = arith.addf %359, %358 : vector<1x32xf32>
    %361 = arith.divf %359, %360 : vector<1x32xf32>
    %362 = vector.extract_strided_slice %349 {offsets = [0, 64], sizes = [1, 32], strides = [1, 1]} : vector<1x128xf32> to vector<1x32xf32>
    %363 = math.tanh %362 : vector<1x32xf32>
    %364 = vector.extract_strided_slice %349 {offsets = [0, 96], sizes = [1, 32], strides = [1, 1]} : vector<1x128xf32> to vector<1x32xf32>
    %365 = arith.negf %364 : vector<1x32xf32>
    %366 = math.exp %365 : vector<1x32xf32>
    %cst_85 = arith.constant 1.000000e+00 : f32
    %367 = vector.broadcast %cst_85 : f32 to vector<1x32xf32>
    %368 = arith.addf %367, %366 : vector<1x32xf32>
    %369 = arith.divf %367, %368 : vector<1x32xf32>
    %370 = arith.mulf %361, %344 : vector<1x32xf32>
    %371 = arith.mulf %355, %363 : vector<1x32xf32>
    %372 = arith.addf %370, %371 : vector<1x32xf32>
    %373 = math.tanh %372 : vector<1x32xf32>
    %374 = arith.mulf %369, %373 : vector<1x32xf32>
    %375 = vector.extract_strided_slice %258 {offsets = [4, 0], sizes = [1, 128], strides = [1, 1]} : vector<8x128xf32> to vector<1x128xf32>
    %cst_86 = arith.constant dense<0.000000e+00> : vector<1x128xf32>
    %376 = tpu.matmul %374, %251, %cst_86 {dimension_numbers = #tpu.dot_dimension_numbers<[1], [0], [0], [1], [0, 0, 1, 1], [], []>} : vector<1x32xf32>, vector<32x128xf32>, vector<1x128xf32> -> vector<1x128xf32>
    %377 = arith.addf %375, %376 : vector<1x128xf32>
    %378 = vector.extract_strided_slice %377 {offsets = [0, 0], sizes = [1, 32], strides = [1, 1]} : vector<1x128xf32> to vector<1x32xf32>
    %379 = arith.negf %378 : vector<1x32xf32>
    %380 = math.exp %379 : vector<1x32xf32>
    %cst_87 = arith.constant 1.000000e+00 : f32
    %381 = vector.broadcast %cst_87 : f32 to vector<1x32xf32>
    %382 = arith.addf %381, %380 : vector<1x32xf32>
    %383 = arith.divf %381, %382 : vector<1x32xf32>
    %384 = vector.extract_strided_slice %377 {offsets = [0, 32], sizes = [1, 32], strides = [1, 1]} : vector<1x128xf32> to vector<1x32xf32>
    %385 = arith.negf %384 : vector<1x32xf32>
    %386 = math.exp %385 : vector<1x32xf32>
    %cst_88 = arith.constant 1.000000e+00 : f32
    %387 = vector.broadcast %cst_88 : f32 to vector<1x32xf32>
    %388 = arith.addf %387, %386 : vector<1x32xf32>
    %389 = arith.divf %387, %388 : vector<1x32xf32>
    %390 = vector.extract_strided_slice %377 {offsets = [0, 64], sizes = [1, 32], strides = [1, 1]} : vector<1x128xf32> to vector<1x32xf32>
    %391 = math.tanh %390 : vector<1x32xf32>
    %392 = vector.extract_strided_slice %377 {offsets = [0, 96], sizes = [1, 32], strides = [1, 1]} : vector<1x128xf32> to vector<1x32xf32>
    %393 = arith.negf %392 : vector<1x32xf32>
    %394 = math.exp %393 : vector<1x32xf32>
    %cst_89 = arith.constant 1.000000e+00 : f32
    %395 = vector.broadcast %cst_89 : f32 to vector<1x32xf32>
    %396 = arith.addf %395, %394 : vector<1x32xf32>
    %397 = arith.divf %395, %396 : vector<1x32xf32>
    %398 = arith.mulf %389, %372 : vector<1x32xf32>
    %399 = arith.mulf %383, %391 : vector<1x32xf32>
    %400 = arith.addf %398, %399 : vector<1x32xf32>
    %401 = math.tanh %400 : vector<1x32xf32>
    %402 = arith.mulf %397, %401 : vector<1x32xf32>
    %403 = vector.extract_strided_slice %258 {offsets = [5, 0], sizes = [1, 128], strides = [1, 1]} : vector<8x128xf32> to vector<1x128xf32>
    %cst_90 = arith.constant dense<0.000000e+00> : vector<1x128xf32>
    %404 = tpu.matmul %402, %251, %cst_90 {dimension_numbers = #tpu.dot_dimension_numbers<[1], [0], [0], [1], [0, 0, 1, 1], [], []>} : vector<1x32xf32>, vector<32x128xf32>, vector<1x128xf32> -> vector<1x128xf32>
    %405 = arith.addf %403, %404 : vector<1x128xf32>
    %406 = vector.extract_strided_slice %405 {offsets = [0, 0], sizes = [1, 32], strides = [1, 1]} : vector<1x128xf32> to vector<1x32xf32>
    %407 = arith.negf %406 : vector<1x32xf32>
    %408 = math.exp %407 : vector<1x32xf32>
    %cst_91 = arith.constant 1.000000e+00 : f32
    %409 = vector.broadcast %cst_91 : f32 to vector<1x32xf32>
    %410 = arith.addf %409, %408 : vector<1x32xf32>
    %411 = arith.divf %409, %410 : vector<1x32xf32>
    %412 = vector.extract_strided_slice %405 {offsets = [0, 32], sizes = [1, 32], strides = [1, 1]} : vector<1x128xf32> to vector<1x32xf32>
    %413 = arith.negf %412 : vector<1x32xf32>
    %414 = math.exp %413 : vector<1x32xf32>
    %cst_92 = arith.constant 1.000000e+00 : f32
    %415 = vector.broadcast %cst_92 : f32 to vector<1x32xf32>
    %416 = arith.addf %415, %414 : vector<1x32xf32>
    %417 = arith.divf %415, %416 : vector<1x32xf32>
    %418 = vector.extract_strided_slice %405 {offsets = [0, 64], sizes = [1, 32], strides = [1, 1]} : vector<1x128xf32> to vector<1x32xf32>
    %419 = math.tanh %418 : vector<1x32xf32>
    %420 = vector.extract_strided_slice %405 {offsets = [0, 96], sizes = [1, 32], strides = [1, 1]} : vector<1x128xf32> to vector<1x32xf32>
    %421 = arith.negf %420 : vector<1x32xf32>
    %422 = math.exp %421 : vector<1x32xf32>
    %cst_93 = arith.constant 1.000000e+00 : f32
    %423 = vector.broadcast %cst_93 : f32 to vector<1x32xf32>
    %424 = arith.addf %423, %422 : vector<1x32xf32>
    %425 = arith.divf %423, %424 : vector<1x32xf32>
    %426 = arith.mulf %417, %400 : vector<1x32xf32>
    %427 = arith.mulf %411, %419 : vector<1x32xf32>
    %428 = arith.addf %426, %427 : vector<1x32xf32>
    %429 = math.tanh %428 : vector<1x32xf32>
    %430 = arith.mulf %425, %429 : vector<1x32xf32>
    %431 = vector.extract_strided_slice %258 {offsets = [6, 0], sizes = [1, 128], strides = [1, 1]} : vector<8x128xf32> to vector<1x128xf32>
    %cst_94 = arith.constant dense<0.000000e+00> : vector<1x128xf32>
    %432 = tpu.matmul %430, %251, %cst_94 {dimension_numbers = #tpu.dot_dimension_numbers<[1], [0], [0], [1], [0, 0, 1, 1], [], []>} : vector<1x32xf32>, vector<32x128xf32>, vector<1x128xf32> -> vector<1x128xf32>
    %433 = arith.addf %431, %432 : vector<1x128xf32>
    %434 = vector.extract_strided_slice %433 {offsets = [0, 0], sizes = [1, 32], strides = [1, 1]} : vector<1x128xf32> to vector<1x32xf32>
    %435 = arith.negf %434 : vector<1x32xf32>
    %436 = math.exp %435 : vector<1x32xf32>
    %cst_95 = arith.constant 1.000000e+00 : f32
    %437 = vector.broadcast %cst_95 : f32 to vector<1x32xf32>
    %438 = arith.addf %437, %436 : vector<1x32xf32>
    %439 = arith.divf %437, %438 : vector<1x32xf32>
    %440 = vector.extract_strided_slice %433 {offsets = [0, 32], sizes = [1, 32], strides = [1, 1]} : vector<1x128xf32> to vector<1x32xf32>
    %441 = arith.negf %440 : vector<1x32xf32>
    %442 = math.exp %441 : vector<1x32xf32>
    %cst_96 = arith.constant 1.000000e+00 : f32
    %443 = vector.broadcast %cst_96 : f32 to vector<1x32xf32>
    %444 = arith.addf %443, %442 : vector<1x32xf32>
    %445 = arith.divf %443, %444 : vector<1x32xf32>
    %446 = vector.extract_strided_slice %433 {offsets = [0, 64], sizes = [1, 32], strides = [1, 1]} : vector<1x128xf32> to vector<1x32xf32>
    %447 = math.tanh %446 : vector<1x32xf32>
    %448 = vector.extract_strided_slice %433 {offsets = [0, 96], sizes = [1, 32], strides = [1, 1]} : vector<1x128xf32> to vector<1x32xf32>
    %449 = arith.negf %448 : vector<1x32xf32>
    %450 = math.exp %449 : vector<1x32xf32>
    %cst_97 = arith.constant 1.000000e+00 : f32
    %451 = vector.broadcast %cst_97 : f32 to vector<1x32xf32>
    %452 = arith.addf %451, %450 : vector<1x32xf32>
    %453 = arith.divf %451, %452 : vector<1x32xf32>
    %454 = arith.mulf %445, %428 : vector<1x32xf32>
    %455 = arith.mulf %439, %447 : vector<1x32xf32>
    %456 = arith.addf %454, %455 : vector<1x32xf32>
    %457 = math.tanh %456 : vector<1x32xf32>
    %458 = arith.mulf %453, %457 : vector<1x32xf32>
    %459 = vector.extract_strided_slice %258 {offsets = [7, 0], sizes = [1, 128], strides = [1, 1]} : vector<8x128xf32> to vector<1x128xf32>
    %cst_98 = arith.constant dense<0.000000e+00> : vector<1x128xf32>
    %460 = tpu.matmul %458, %251, %cst_98 {dimension_numbers = #tpu.dot_dimension_numbers<[1], [0], [0], [1], [0, 0, 1, 1], [], []>} : vector<1x32xf32>, vector<32x128xf32>, vector<1x128xf32> -> vector<1x128xf32>
    %461 = arith.addf %459, %460 : vector<1x128xf32>
    %462 = vector.extract_strided_slice %461 {offsets = [0, 0], sizes = [1, 32], strides = [1, 1]} : vector<1x128xf32> to vector<1x32xf32>
    %463 = arith.negf %462 : vector<1x32xf32>
    %464 = math.exp %463 : vector<1x32xf32>
    %cst_99 = arith.constant 1.000000e+00 : f32
    %465 = vector.broadcast %cst_99 : f32 to vector<1x32xf32>
    %466 = arith.addf %465, %464 : vector<1x32xf32>
    %467 = arith.divf %465, %466 : vector<1x32xf32>
    %468 = vector.extract_strided_slice %461 {offsets = [0, 32], sizes = [1, 32], strides = [1, 1]} : vector<1x128xf32> to vector<1x32xf32>
    %469 = arith.negf %468 : vector<1x32xf32>
    %470 = math.exp %469 : vector<1x32xf32>
    %cst_100 = arith.constant 1.000000e+00 : f32
    %471 = vector.broadcast %cst_100 : f32 to vector<1x32xf32>
    %472 = arith.addf %471, %470 : vector<1x32xf32>
    %473 = arith.divf %471, %472 : vector<1x32xf32>
    %474 = vector.extract_strided_slice %461 {offsets = [0, 64], sizes = [1, 32], strides = [1, 1]} : vector<1x128xf32> to vector<1x32xf32>
    %475 = math.tanh %474 : vector<1x32xf32>
    %476 = vector.extract_strided_slice %461 {offsets = [0, 96], sizes = [1, 32], strides = [1, 1]} : vector<1x128xf32> to vector<1x32xf32>
    %477 = arith.negf %476 : vector<1x32xf32>
    %478 = math.exp %477 : vector<1x32xf32>
    %cst_101 = arith.constant 1.000000e+00 : f32
    %479 = vector.broadcast %cst_101 : f32 to vector<1x32xf32>
    %480 = arith.addf %479, %478 : vector<1x32xf32>
    %481 = arith.divf %479, %480 : vector<1x32xf32>
    %482 = arith.mulf %473, %456 : vector<1x32xf32>
    %483 = arith.mulf %467, %475 : vector<1x32xf32>
    %484 = arith.addf %482, %483 : vector<1x32xf32>
    %485 = math.tanh %484 : vector<1x32xf32>
    %486 = arith.mulf %481, %485 : vector<1x32xf32>
    %c1_102 = arith.constant 1 : index
    %c0_103 = arith.constant 0 : index
    %c0_104 = arith.constant 0 : index
    %487 = vector.load %arg15[%c1_102, %c0_103, %c0_104] : memref<2x1x32xf32, #tpu.memory_space<vmem>>, vector<1x1x32xf32>
    %488 = vector.shape_cast %487 : vector<1x1x32xf32> to vector<1x32xf32>
    %489 = vector.shape_cast %486 : vector<1x32xf32> to vector<1x1x32xf32>
    tpu.vector_store %arg15[%c1_102, %c0_103, %c0_104], %489 {strides = array<i32>} : memref<2x1x32xf32, #tpu.memory_space<vmem>>, vector<1x1x32xf32>,
    %c1_105 = arith.constant 1 : index
    %c0_106 = arith.constant 0 : index
    %c0_107 = arith.constant 0 : index
    %490 = vector.load %arg16[%c1_105, %c0_106, %c0_107] : memref<2x1x32xf32, #tpu.memory_space<vmem>>, vector<1x1x32xf32>
    %491 = vector.shape_cast %490 : vector<1x1x32xf32> to vector<1x32xf32>
    %492 = vector.shape_cast %484 : vector<1x32xf32> to vector<1x1x32xf32>
    tpu.vector_store %arg16[%c1_105, %c0_106, %c0_107], %492 {strides = array<i32>} : memref<2x1x32xf32, #tpu.memory_space<vmem>>, vector<1x1x32xf32>,
    %493 = tpu.concatenate %290, %318, %346, %374, %402, %430, %458, %486 in 0 : vector<1x32xf32>, vector<1x32xf32>, vector<1x32xf32>, vector<1x32xf32>, vector<1x32xf32>, vector<1x32xf32>, vector<1x32xf32>, vector<1x32xf32> -> vector<8x32xf32>
    %c0_108 = arith.constant 0 : index
    %c0_109 = arith.constant 0 : index
    %494 = vector.load %arg12[%c0_108, %c0_109] : memref<32x32xf32, #tpu.memory_space<vmem>>, vector<32x32xf32>
    %cst_110 = arith.constant dense<0.000000e+00> : vector<8x32xf32>
    %495 = tpu.matmul %493, %494, %cst_110 {dimension_numbers = #tpu.dot_dimension_numbers<[1], [0], [0], [1], [0, 0, 1, 1], [], []>} : vector<8x32xf32>, vector<32x32xf32>, vector<8x32xf32> -> vector<8x32xf32>
    %c0_111 = arith.constant 0 : index
    %c0_112 = arith.constant 0 : index
    %496 = vector.load %arg13[%c0_111, %c0_112] : memref<1x32xf32, #tpu.memory_space<vmem>>, vector<1x32xf32>
    %497 = vector.broadcast %496 : vector<1x32xf32> to vector<8x32xf32>
    %498 = arith.addf %495, %497 : vector<8x32xf32>
    %c0_113 = arith.constant 0 : index
    %c0_114 = arith.constant 0 : index
    %499 = vector.load %arg14[%c0_113, %c0_114] : memref<8x32xf32, #tpu.memory_space<vmem>>, vector<8x32xf32>
    tpu.vector_store %arg14[%c0_113, %c0_114], %498 {strides = array<i32>} : memref<8x32xf32, #tpu.memory_space<vmem>>, vector<8x32xf32>,
    return
  }
}

</mosaic_0001>

<llo_original>
// kernel: tpu_custom_call.1
$region0: #{tpu_custom_call.1}
  #allocation0 [shape = 'u32[]', space=smem, size = 0x4, offset = 0x4, fixed_abs, tag = 'smem constant byte address 0x4 - core index']
  #allocation1 [shape = 'u32[72,128]{1,0:T(1,128)}', space=vmem, size = 0x9000, scoped, tag = 'internal scratch']
  %s0 = inlined_call_operand.vmem [shape: s32[8,1], index: 0, kind: input, shape index: {}]
  %s1 = inlined_call_operand.hbm [shape: f32[32,32], index: 1, kind: input, shape index: {}]
  %s2 = inlined_call_operand.vmem [shape: f32[2,1,32], index: 2, kind: input, shape index: {}]
  %s3 = inlined_call_operand.vmem [shape: f32[2,1,32], index: 3, kind: input, shape index: {}]
  %s4 = inlined_call_operand.hbm [shape: f32[32,128], index: 4, kind: input, shape index: {}]
  %s5 = inlined_call_operand.hbm [shape: f32[32,128], index: 5, kind: input, shape index: {}]
  %s6 = inlined_call_operand.vmem [shape: f32[1,128], index: 6, kind: input, shape index: {}]
  %s7 = inlined_call_operand.vmem [shape: f32[1,128], index: 7, kind: input, shape index: {}]
  %s8 = inlined_call_operand.hbm [shape: f32[32,128], index: 8, kind: input, shape index: {}]
  %s9 = inlined_call_operand.hbm [shape: f32[32,128], index: 9, kind: input, shape index: {}]
  %s10 = inlined_call_operand.vmem [shape: f32[1,128], index: 10, kind: input, shape index: {}]
  %s11 = inlined_call_operand.vmem [shape: f32[1,128], index: 11, kind: input, shape index: {}]
  %s12 = inlined_call_operand.hbm [shape: f32[32,32], index: 12, kind: input, shape index: {}]
  %s13 = inlined_call_operand.vmem [shape: f32[1,32], index: 13, kind: input, shape index: {}]
  %s14 = inlined_call_operand.hbm [shape: f32[8,32], index: 14, kind: output, shape index: {0}]
  %s15 = inlined_call_operand.hbm [shape: f32[2,1,32], index: 15, kind: output, shape index: {1}]
  %s16 = inlined_call_operand.hbm [shape: f32[2,1,32], index: 16, kind: output, shape index: {2}]
  %17 = xla_tuple %s14, %s15, %s16
  %s18 = sld [smem:[#allocation0]]
  $region106: #{tpu_custom_call.1} parent=0
    _
  %s20 = ssub.s32 1, %s18
  %s21 = scalar_select 0, %s20, %s18
  $region1: #{tpu_custom_call.1} parent=0
    #allocation2 [shape = 'u8[16384]{0}', space=vmem, size = 0x4000, scoped, tag = 'input window, operand 1, single buffered']
    #allocation3 [shape = 's32[1]{0}', space=sflag, size = 0x4, scoped, tag = 'scoped memory for tpu_custom_call.1']
    #allocation4 [shape = 's32[1]{0}', space=sflag, size = 0x4, scoped, tag = 'scoped memory for tpu_custom_call.1']
    #allocation5 [shape = 'u8[16384]{0}', space=vmem, size = 0x4000, scoped, tag = 'input window, operand 4, single buffered']
    #allocation6 [shape = 's32[1]{0}', space=sflag, size = 0x4, scoped, tag = 'scoped memory for tpu_custom_call.1']
    #allocation7 [shape = 'u8[16384]{0}', space=vmem, size = 0x4000, scoped, tag = 'input window, operand 5, single buffered']
    #allocation8 [shape = 'u8[16384]{0}', space=vmem, size = 0x4000, scoped, tag = 'input window, operand 8, single buffered']
    #allocation9 [shape = 's32[1]{0}', space=sflag, size = 0x4, scoped, tag = 'scoped memory for tpu_custom_call.1']
    #allocation10 [shape = 'u8[16384]{0}', space=vmem, size = 0x4000, scoped, tag = 'input window, operand 9, single buffered']
    #allocation11 [shape = 'u8[16384]{0}', space=vmem, size = 0x4000, scoped, tag = 'input window, operand 12, single buffered']
    #allocation12 [shape = 's32[1]{0}', space=sflag, size = 0x4, scoped, tag = 'scoped memory for tpu_custom_call.1']
    #allocation13 [shape = 'u8[4096]{0}', space=vmem, size = 0x1000, scoped, tag = 'output window, operand 0, single buffered']
    #allocation14 [shape = 'u8[1024]{0}', space=vmem, size = 0x400, scoped, tag = 'output window, operand 1, single buffered']
    #allocation15 [shape = 's32[1]{0}', space=sflag, size = 0x4, scoped, tag = 'scoped memory for tpu_custom_call.1']
    #allocation16 [shape = 'u8[1024]{0}', space=vmem, size = 0x400, scoped, tag = 'output window, operand 2, single buffered']
    %22 = vsyncpa [#allocation3], 0
    %23 = vsyncpa [#allocation6], 0
    %24 = vsyncpa [#allocation9], 0
    %25 = vsyncpa [#allocation12], 0
    %26 = vsyncpa [#allocation4], 0
    %27 = vsyncpa [#allocation15], 0
    // Predicated region
    $region2: #{tpu_custom_call.1} parent=1 // pred_check
      _
    $region3: #{tpu_custom_call.1} parent=1 // pred_check_branch
      %29 = sbr.rel (0) target = $region5
    $region4: #{tpu_custom_call.1} parent=1 // pred_region
      _
    $region5: #{tpu_custom_call.1} parent=1 // pred_fallthru
      _
    // Predicated region
    $region6: #{tpu_custom_call.1} parent=1 // pred_check
      _
    $region7: #{tpu_custom_call.1} parent=1 // pred_check_branch
      %31 = sbr.rel (0) target = $region9
    $region8: #{tpu_custom_call.1} parent=1 // pred_region
      %33 = vsyncadd [#allocation3], 0
      %s34 = sshll.u32 %s1, 4
      %s35 = int_to_ptr.hbm [resolvable:$true] %s34
      %s36 = sshll.u32 [#allocation2], 4
      %s37 = int_to_ptr.vmem [resolvable:$true] %s36
      %42 = dma.hbm_to_vmem [thread:$0]  %s35, 512, %s37, [#allocation3], 128, 128, 8
    $region9: #{tpu_custom_call.1} parent=1 // pred_fallthru
      _
    // Predicated region
    $region10: #{tpu_custom_call.1} parent=1 // pred_check
      _
    $region11: #{tpu_custom_call.1} parent=1 // pred_check_branch
      %44 = sbr.rel (0) target = $region13
    $region12: #{tpu_custom_call.1} parent=1 // pred_region
      _
    $region13: #{tpu_custom_call.1} parent=1 // pred_fallthru
      _
    // Predicated region
    $region14: #{tpu_custom_call.1} parent=1 // pred_check
      _
    $region15: #{tpu_custom_call.1} parent=1 // pred_check_branch
      %46 = sbr.rel (0) target = $region17
    $region16: #{tpu_custom_call.1} parent=1 // pred_region
      _
    $region17: #{tpu_custom_call.1} parent=1 // pred_fallthru
      _
    // Predicated region
    $region18: #{tpu_custom_call.1} parent=1 // pred_check
      _
    $region19: #{tpu_custom_call.1} parent=1 // pred_check_branch
      %48 = sbr.rel (0) target = $region21
    $region20: #{tpu_custom_call.1} parent=1 // pred_region
      %50 = vsyncadd [#allocation6], 0
      %s51 = sshll.u32 %s4, 4
      %s52 = int_to_ptr.hbm [resolvable:$true] %s51
      %s53 = sshll.u32 [#allocation5], 4
      %s54 = int_to_ptr.vmem [resolvable:$true] %s53
      %59 = dma.hbm_to_vmem [thread:$0]  %s52, 512, %s54, [#allocation6], 128, 128, 8
    $region21: #{tpu_custom_call.1} parent=1 // pred_fallthru
      _
    // Predicated region
    $region22: #{tpu_custom_call.1} parent=1 // pred_check
      _
    $region23: #{tpu_custom_call.1} parent=1 // pred_check_branch
      %61 = sbr.rel (0) target = $region25
    $region24: #{tpu_custom_call.1} parent=1 // pred_region
      %63 = vsyncadd [#allocation6], 0
      %s64 = sshll.u32 %s5, 4
      %s65 = int_to_ptr.hbm [resolvable:$true] %s64
      %s66 = sshll.u32 [#allocation7], 4
      %s67 = int_to_ptr.vmem [resolvable:$true] %s66
      %72 = dma.hbm_to_vmem [thread:$0]  %s65, 512, %s67, [#allocation6], 128, 128, 8
    $region25: #{tpu_custom_call.1} parent=1 // pred_fallthru
      _
    // Predicated region
    $region26: #{tpu_custom_call.1} parent=1 // pred_check
      _
    $region27: #{tpu_custom_call.1} parent=1 // pred_check_branch
      %74 = sbr.rel (0) target = $region29
    $region28: #{tpu_custom_call.1} parent=1 // pred_region
      _
    $region29: #{tpu_custom_call.1} parent=1 // pred_fallthru
      _
    // Predicated region
    $region30: #{tpu_custom_call.1} parent=1 // pred_check
      _
    $region31: #{tpu_custom_call.1} parent=1 // pred_check_branch
      %76 = sbr.rel (0) target = $region33
    $region32: #{tpu_custom_call.1} parent=1 // pred_region
      _
    $region33: #{tpu_custom_call.1} parent=1 // pred_fallthru
      _
    // Predicated region
    $region34: #{tpu_custom_call.1} parent=1 // pred_check
      _
    $region35: #{tpu_custom_call.1} parent=1 // pred_check_branch
      %78 = sbr.rel (0) target = $region37
    $region36: #{tpu_custom_call.1} parent=1 // pred_region
      %80 = vsyncadd [#allocation9], 0
      %s81 = sshll.u32 %s8, 4
      %s82 = int_to_ptr.hbm [resolvable:$true] %s81
      %s83 = sshll.u32 [#allocation8], 4
      %s84 = int_to_ptr.vmem [resolvable:$true] %s83
      %89 = dma.hbm_to_vmem [thread:$0]  %s82, 512, %s84, [#allocation9], 128, 128, 8
    $region37: #{tpu_custom_call.1} parent=1 // pred_fallthru
      _
    // Predicated region
    $region38: #{tpu_custom_call.1} parent=1 // pred_check
      _
    $region39: #{tpu_custom_call.1} parent=1 // pred_check_branch
      %91 = sbr.rel (0) target = $region41
    $region40: #{tpu_custom_call.1} parent=1 // pred_region
      %93 = vsyncadd [#allocation9], 0
      %s94 = sshll.u32 %s9, 4
      %s95 = int_to_ptr.hbm [resolvable:$true] %s94
      %s96 = sshll.u32 [#allocation10], 4
      %s97 = int_to_ptr.vmem [resolvable:$true] %s96
      %102 = dma.hbm_to_vmem [thread:$0]  %s95, 512, %s97, [#allocation9], 128, 128, 8
    $region41: #{tpu_custom_call.1} parent=1 // pred_fallthru
      _
    // Predicated region
    $region42: #{tpu_custom_call.1} parent=1 // pred_check
      _
    $region43: #{tpu_custom_call.1} parent=1 // pred_check_branch
      %104 = sbr.rel (0) target = $region45
    $region44: #{tpu_custom_call.1} parent=1 // pred_region
      _
    $region45: #{tpu_custom_call.1} parent=1 // pred_fallthru
      _
    // Predicated region
    $region46: #{tpu_custom_call.1} parent=1 // pred_check
      _
    $region47: #{tpu_custom_call.1} parent=1 // pred_check_branch
      %106 = sbr.rel (0) target = $region49
    $region48: #{tpu_custom_call.1} parent=1 // pred_region
      _
    $region49: #{tpu_custom_call.1} parent=1 // pred_fallthru
      _
    // Predicated region
    $region50: #{tpu_custom_call.1} parent=1 // pred_check
      _
    $region51: #{tpu_custom_call.1} parent=1 // pred_check_branch
      %108 = sbr.rel (0) target = $region53
    $region52: #{tpu_custom_call.1} parent=1 // pred_region
      %110 = vsyncadd [#allocation12], 0
      %s111 = sshll.u32 %s12, 4
      %s112 = int_to_ptr.hbm [resolvable:$true] %s111
      %s113 = sshll.u32 [#allocation11], 4
      %s114 = int_to_ptr.vmem [resolvable:$true] %s113
      %119 = dma.hbm_to_vmem [thread:$0]  %s112, 512, %s114, [#allocation12], 128, 128, 8
    $region53: #{tpu_custom_call.1} parent=1 // pred_fallthru
      _
    // Predicated region
    $region54: #{tpu_custom_call.1} parent=1 // pred_check
      _
    $region55: #{tpu_custom_call.1} parent=1 // pred_check_branch
      %121 = sbr.rel (0) target = $region57
    $region56: #{tpu_custom_call.1} parent=1 // pred_region
      _
    $region57: #{tpu_custom_call.1} parent=1 // pred_fallthru
      _
    // Predicated region
    $region58: #{tpu_custom_call.1} parent=1 // pred_check
      _
    $region59: #{tpu_custom_call.1} parent=1 // pred_check_branch
      %123 = sbr.rel (0) target = $region61
    $region60: #{tpu_custom_call.1} parent=1 // pred_region
      %125 = dma.done [#allocation3], 512
    $region61: #{tpu_custom_call.1} parent=1 // pred_fallthru
      _
    // Predicated region
    $region62: #{tpu_custom_call.1} parent=1 // pred_check
      _
    $region63: #{tpu_custom_call.1} parent=1 // pred_check_branch
      %127 = sbr.rel (0) target = $region65
    $region64: #{tpu_custom_call.1} parent=1 // pred_region
      %129 = dma.done [#allocation6], 512
    $region65: #{tpu_custom_call.1} parent=1 // pred_fallthru
      _
    // Predicated region
    $region66: #{tpu_custom_call.1} parent=1 // pred_check
      _
    $region67: #{tpu_custom_call.1} parent=1 // pred_check_branch
      %131 = sbr.rel (0) target = $region69
    $region68: #{tpu_custom_call.1} parent=1 // pred_region
      %133 = dma.done [#allocation6], 512
    $region69: #{tpu_custom_call.1} parent=1 // pred_fallthru
      _
    // Predicated region
    $region70: #{tpu_custom_call.1} parent=1 // pred_check
      _
    $region71: #{tpu_custom_call.1} parent=1 // pred_check_branch
      %135 = sbr.rel (0) target = $region73
    $region72: #{tpu_custom_call.1} parent=1 // pred_region
      %137 = dma.done [#allocation9], 512
    $region73: #{tpu_custom_call.1} parent=1 // pred_fallthru
      _
    // Predicated region
    $region74: #{tpu_custom_call.1} parent=1 // pred_check
      _
    $region75: #{tpu_custom_call.1} parent=1 // pred_check_branch
      %139 = sbr.rel (0) target = $region77
    $region76: #{tpu_custom_call.1} parent=1 // pred_region
      %141 = dma.done [#allocation9], 512
    $region77: #{tpu_custom_call.1} parent=1 // pred_fallthru
      _
    // Predicated region
    $region78: #{tpu_custom_call.1} parent=1 // pred_check
      _
    $region79: #{tpu_custom_call.1} parent=1 // pred_check_branch
      %143 = sbr.rel (0) target = $region81
    $region80: #{tpu_custom_call.1} parent=1 // pred_region
      %145 = dma.done [#allocation12], 512
    $region81: #{tpu_custom_call.1} parent=1 // pred_fallthru
      _
    %v146 = vld [vmem:[%s0] sm:$0xff]
    %v147 = vlaneseq
    %v148 = vand.u32 %v147, 127
    %149 = vset.pattern.permute.xlu0 0
    %150 = vperm.xlu0 %149, %v146
    %v151 = vpop.permute.xlu0 %150
    %vm152 = vcmp.eq.s32.totalorder %v151, %v148
    %v153 = vsel %vm152, 1, 0
    %v154 = vcvt.s32.f32 %v153
    %v155 = vld [vmem:[#allocation2] sm:$0xff]
    %v156 = vld [vmem:[#allocation2 + $0x8] sm:$0xff]
    %v157 = vld [vmem:[#allocation2 + $0x10] sm:$0xff]
    %v158 = vld [vmem:[#allocation2 + $0x18] sm:$0xff]
    %vm159 = vcmask 261120
    %v161 = vsel %vm159, %v154, 0
    %163 = vmatpush.msra.mxu0 0.0
    %164 = vmatpush.msra.mxu0 0.0
    %165 = vmatpush.msra.mxu0 0.0
    %166 = vmatpush.msra.mxu0 0.0
    %167 = vmatpush.msra.mxu0 0.0
    %168 = vmatpush.msra.mxu0 0.0
    %169 = vmatpush.msra.mxu0 0.0
    %170 = vmatpush.msra.mxu0 0.0
    %171 = vmatpush.msra.mxu0 0.0
    %172 = vmatpush.msra.mxu0 0.0
    %173 = vmatpush.msra.mxu0 0.0
    %174 = vmatpush.msra.mxu0 0.0
    %175 = vmatpush.msra.mxu0 %v158
    %176 = vmatpush.msra.mxu0 %v157
    %177 = vmatpush.msra.mxu0 %v156
    %178 = vmatpush.msra.mxu0 %v155
    %179 = vmatmul.f32.gmra.mxu0 %v161
    %v180 = vpop.f32.mrf.mxu0
    %v181 = vadd.f32 0.0, %v180
    %182 = vdwg.mxu0
    %v183 = vld [vmem:[#allocation7] sm:$0xff]
    %v184 = vld [vmem:[#allocation7 + $0x8] sm:$0xff]
    %v185 = vld [vmem:[#allocation7 + $0x10] sm:$0xff]
    %v186 = vld [vmem:[#allocation7 + $0x18] sm:$0xff]
    %v187 = vld [vmem:[%s6] sm:$0x1]
    %v188 = vld [vmem:[%s7] sm:$0x1]
    %v189 = vadd.f32 %v187, %v188
    %v190 = vld [vmem:[#allocation5] sm:$0xff]
    %v191 = vld [vmem:[#allocation5 + $0x8] sm:$0xff]
    %v192 = vld [vmem:[#allocation5 + $0x10] sm:$0xff]
    %v193 = vld [vmem:[#allocation5 + $0x18] sm:$0xff]
    %v195 = vperm.slane %v189, 0
    %v198 = vsel %vm159, %v181, 0
    %200 = vmatpush.msra.mxu0 0.0
    %201 = vmatpush.msra.mxu0 0.0
    %202 = vmatpush.msra.mxu0 0.0
    %203 = vmatpush.msra.mxu0 0.0
    %204 = vmatpush.msra.mxu0 0.0
    %205 = vmatpush.msra.mxu0 0.0
    %206 = vmatpush.msra.mxu0 0.0
    %207 = vmatpush.msra.mxu0 0.0
    %208 = vmatpush.msra.mxu0 0.0
    %209 = vmatpush.msra.mxu0 0.0
    %210 = vmatpush.msra.mxu0 0.0
    %211 = vmatpush.msra.mxu0 0.0
    %212 = vmatpush.msra.mxu0 %v193
    %213 = vmatpush.msra.mxu0 %v192
    %214 = vmatpush.msra.mxu0 %v191
    %215 = vmatpush.msra.mxu0 %v190
    %216 = vmatmul.f32.gmra.mxu0 %v198
    %v217 = vpop.f32.mrf.mxu0
    %v218 = vadd.f32 %v195, %v217
    %219 = vdwg.mxu0
    %v220 = vld [vmem:[%s2] sm:$0x1]
    %v221 = vld [vmem:[%s3] sm:$0x1]
    %v223 = vsel %vm159, %v220, 0
    %225 = vmatpush.msra.mxu0 0.0
    %226 = vmatpush.msra.mxu0 0.0
    %227 = vmatpush.msra.mxu0 0.0
    %228 = vmatpush.msra.mxu0 0.0
    %229 = vmatpush.msra.mxu0 0.0
    %230 = vmatpush.msra.mxu0 0.0
    %231 = vmatpush.msra.mxu0 0.0
    %232 = vmatpush.msra.mxu0 0.0
    %233 = vmatpush.msra.mxu0 0.0
    %234 = vmatpush.msra.mxu0 0.0
    %235 = vmatpush.msra.mxu0 0.0
    %236 = vmatpush.msra.mxu0 0.0
    %237 = vmatpush.msra.mxu0 %v186
    %238 = vmatpush.msra.mxu0 %v185
    %239 = vmatpush.msra.mxu0 %v184
    %240 = vmatpush.msra.mxu0 %v183
    %241 = vmatmul.f32.gmra.mxu0 %v223
    %v242 = vpop.f32.mrf.mxu0
    %v243 = vadd.f32 0.0, %v242
    %244 = vdwg.mxu0
    %v245 = vadd.f32 %v218, %v243
    %v246 = vxor.u32 %v245, 2147483648
    %v247 = vmul.f32 %v246, 1.442695
    %v248 = vpow.pop %v247
    %v249 = vadd.f32 %v248, 1.0
    %v250 = vrcp.pop %v249
    %v251 = vmul.f32 %v249, %v250
    %v252 = vsub.f32 1.0, %v251
    %v253 = vmul.f32 %v250, %v252
    %v254 = vadd.f32 %v250, %v253
    %vm255 = vweird.f32 %v249
    %vm256 = vweird.f32 %v250
    %vm257 = vmor %vm255, %vm256
    %v258 = vsel %vm257, %v250, %v254
    %v259 = vand.u32 2147483647, %v249
    %vm260 = vcmp.eq.f32.partialorder %v259, 8.507059e+37
    %v261 = vand.u32 %v249, 2147483648
    %v262 = vor.u32 1.1754944e-38, %v261
    %v263 = vsel %vm260, %v262, %v258
    %v264 = vmul.f32 1.0, %v263
    %v265 = vtanh.pop %v245
    %v267 = vperm.slane %v221, 0
    %268 = vrot.lane.b32.xlu0 %v267, 32
    %v269 = vpop.permute.xlu0 %268
    %v271 = vmul.f32 %v264, %v269
    %273 = vrot.lane.b32.xlu0 %v265, 64
    %v274 = vpop.permute.xlu0 %273
    %v276 = vmul.f32 %v264, %v274
    %278 = vrot.lane.b32.xlu0 %v276, 32
    %v279 = vpop.permute.xlu0 %278
    %v281 = vadd.f32 %v271, %v279
    %v282 = vtanh.pop %v281
    %284 = vrot.lane.b32.xlu0 %v282, 64
    %v285 = vpop.permute.xlu0 %284
    %v287 = vmul.f32 %v264, %v285
    %289 = vrot.lane.b32.xlu0 %v287, 32
    %v290 = vpop.permute.xlu0 %289
    %v291 = vsel %vm159, %v290, 0
    %293 = vmatpush.msra.mxu0 0.0
    %294 = vmatpush.msra.mxu0 0.0
    %295 = vmatpush.msra.mxu0 0.0
    %296 = vmatpush.msra.mxu0 0.0
    %297 = vmatpush.msra.mxu0 0.0
    %298 = vmatpush.msra.mxu0 0.0
    %299 = vmatpush.msra.mxu0 0.0
    %300 = vmatpush.msra.mxu0 0.0
    %301 = vmatpush.msra.mxu0 0.0
    %302 = vmatpush.msra.mxu0 0.0
    %303 = vmatpush.msra.mxu0 0.0
    %304 = vmatpush.msra.mxu0 0.0
    %305 = vmatpush.msra.mxu0 %v186
    %306 = vmatpush.msra.mxu0 %v185
    %307 = vmatpush.msra.mxu0 %v184
    %308 = vmatpush.msra.mxu0 %v183
    %309 = vmatmul.f32.gmra.mxu0 %v291
    %v310 = vpop.f32.mrf.mxu0
    %v311 = vadd.f32 0.0, %v310
    %312 = vdwg.mxu0
    %v314 = vrot.slane %v311, 7
    %v316 = vadd.f32 %v218, %v314
    %v317 = vxor.u32 %v316, 2147483648
    %v318 = vmul.f32 %v317, 1.442695
    %v319 = vpow.pop %v318
    %v320 = vadd.f32 %v319, 1.0
    %v321 = vrcp.pop %v320
    %v322 = vmul.f32 %v320, %v321
    %v323 = vsub.f32 1.0, %v322
    %v324 = vmul.f32 %v321, %v323
    %v325 = vadd.f32 %v321, %v324
    %vm326 = vweird.f32 %v320
    %vm327 = vweird.f32 %v321
    %vm328 = vmor %vm326, %vm327
    %v329 = vsel %vm328, %v321, %v325
    %v330 = vand.u32 2147483647, %v320
    %vm331 = vcmp.eq.f32.partialorder %v330, 8.507059e+37
    %v332 = vand.u32 %v320, 2147483648
    %v333 = vor.u32 1.1754944e-38, %v332
    %v334 = vsel %vm331, %v333, %v329
    %v335 = vmul.f32 1.0, %v334
    %v336 = vtanh.pop %v316
    %v338 = vrot.slane %v281, 7
    %v340 = vmul.f32 %v335, %v338
    %342 = vrot.lane.b32.xlu0 %v336, 64
    %v343 = vpop.permute.xlu0 %342
    %v345 = vmul.f32 %v335, %v343
    %347 = vrot.lane.b32.xlu0 %v345, 32
    %v348 = vpop.permute.xlu0 %347
    %v350 = vadd.f32 %v340, %v348
    %v351 = vtanh.pop %v350
    %353 = vrot.lane.b32.xlu0 %v351, 64
    %v354 = vpop.permute.xlu0 %353
    %v356 = vmul.f32 %v335, %v354
    %v358 = vrot.slane %v356, 1
    %359 = vrot.lane.b32.xlu0 %v358, 32
    %v360 = vpop.permute.xlu0 %359
    %v361 = vsel %vm159, %v360, 0
    %363 = vmatpush.msra.mxu0 0.0
    %364 = vmatpush.msra.mxu0 0.0
    %365 = vmatpush.msra.mxu0 0.0
    %366 = vmatpush.msra.mxu0 0.0
    %367 = vmatpush.msra.mxu0 0.0
    %368 = vmatpush.msra.mxu0 0.0
    %369 = vmatpush.msra.mxu0 0.0
    %370 = vmatpush.msra.mxu0 0.0
    %371 = vmatpush.msra.mxu0 0.0
    %372 = vmatpush.msra.mxu0 0.0
    %373 = vmatpush.msra.mxu0 0.0
    %374 = vmatpush.msra.mxu0 0.0
    %375 = vmatpush.msra.mxu0 %v186
    %376 = vmatpush.msra.mxu0 %v185
    %377 = vmatpush.msra.mxu0 %v184
    %378 = vmatpush.msra.mxu0 %v183
    %379 = vmatmul.f32.gmra.mxu0 %v361
    %v380 = vpop.f32.mrf.mxu0
    %v381 = vadd.f32 0.0, %v380
    %382 = vdwg.mxu0
    %v384 = vrot.slane %v381, 6
    %v386 = vadd.f32 %v218, %v384
    %v387 = vxor.u32 %v386, 2147483648
    %v388 = vmul.f32 %v387, 1.442695
    %v389 = vpow.pop %v388
    %v390 = vadd.f32 %v389, 1.0
    %v391 = vrcp.pop %v390
    %v392 = vmul.f32 %v390, %v391
    %v393 = vsub.f32 1.0, %v392
    %v394 = vmul.f32 %v391, %v393
    %v395 = vadd.f32 %v391, %v394
    %vm396 = vweird.f32 %v390
    %vm397 = vweird.f32 %v391
    %vm398 = vmor %vm396, %vm397
    %v399 = vsel %vm398, %v391, %v395
    %v400 = vand.u32 2147483647, %v390
    %vm401 = vcmp.eq.f32.partialorder %v400, 8.507059e+37
    %v402 = vand.u32 %v390, 2147483648
    %v403 = vor.u32 1.1754944e-38, %v402
    %v404 = vsel %vm401, %v403, %v399
    %v405 = vmul.f32 1.0, %v404
    %v406 = vtanh.pop %v386
    %v408 = vrot.slane %v350, 7
    %v410 = vmul.f32 %v405, %v408
    %412 = vrot.lane.b32.xlu0 %v406, 64
    %v413 = vpop.permute.xlu0 %412
    %v415 = vmul.f32 %v405, %v413
    %417 = vrot.lane.b32.xlu0 %v415, 32
    %v418 = vpop.permute.xlu0 %417
    %v420 = vadd.f32 %v410, %v418
    %v421 = vtanh.pop %v420
    %423 = vrot.lane.b32.xlu0 %v421, 64
    %v424 = vpop.permute.xlu0 %423
    %v426 = vmul.f32 %v405, %v424
    %v428 = vrot.slane %v426, 2
    %429 = vrot.lane.b32.xlu0 %v428, 32
    %v430 = vpop.permute.xlu0 %429
    %v431 = vsel %vm159, %v430, 0
    %433 = vmatpush.msra.mxu0 0.0
    %434 = vmatpush.msra.mxu0 0.0
    %435 = vmatpush.msra.mxu0 0.0
    %436 = vmatpush.msra.mxu0 0.0
    %437 = vmatpush.msra.mxu0 0.0
    %438 = vmatpush.msra.mxu0 0.0
    %439 = vmatpush.msra.mxu0 0.0
    %440 = vmatpush.msra.mxu0 0.0
    %441 = vmatpush.msra.mxu0 0.0
    %442 = vmatpush.msra.mxu0 0.0
    %443 = vmatpush.msra.mxu0 0.0
    %444 = vmatpush.msra.mxu0 0.0
    %445 = vmatpush.msra.mxu0 %v186
    %446 = vmatpush.msra.mxu0 %v185
    %447 = vmatpush.msra.mxu0 %v184
    %448 = vmatpush.msra.mxu0 %v183
    %449 = vmatmul.f32.gmra.mxu0 %v431
    %v450 = vpop.f32.mrf.mxu0
    %v451 = vadd.f32 0.0, %v450
    %452 = vdwg.mxu0
    %v454 = vrot.slane %v451, 5
    %v456 = vadd.f32 %v218, %v454
    %v457 = vxor.u32 %v456, 2147483648
    %v458 = vmul.f32 %v457, 1.442695
    %v459 = vpow.pop %v458
    %v460 = vadd.f32 %v459, 1.0
    %v461 = vrcp.pop %v460
    %v462 = vmul.f32 %v460, %v461
    %v463 = vsub.f32 1.0, %v462
    %v464 = vmul.f32 %v461, %v463
    %v465 = vadd.f32 %v461, %v464
    %vm466 = vweird.f32 %v460
    %vm467 = vweird.f32 %v461
    %vm468 = vmor %vm466, %vm467
    %v469 = vsel %vm468, %v461, %v465
    %v470 = vand.u32 2147483647, %v460
    %vm471 = vcmp.eq.f32.partialorder %v470, 8.507059e+37
    %v472 = vand.u32 %v460, 2147483648
    %v473 = vor.u32 1.1754944e-38, %v472
    %v474 = vsel %vm471, %v473, %v469
    %v475 = vmul.f32 1.0, %v474
    %v476 = vtanh.pop %v456
    %v478 = vrot.slane %v420, 7
    %v480 = vmul.f32 %v475, %v478
    %482 = vrot.lane.b32.xlu0 %v476, 64
    %v483 = vpop.permute.xlu0 %482
    %v485 = vmul.f32 %v475, %v483
    %487 = vrot.lane.b32.xlu0 %v485, 32
    %v488 = vpop.permute.xlu0 %487
    %v490 = vadd.f32 %v480, %v488
    %v491 = vtanh.pop %v490
    %493 = vrot.lane.b32.xlu0 %v491, 64
    %v494 = vpop.permute.xlu0 %493
    %v496 = vmul.f32 %v475, %v494
    %v498 = vrot.slane %v496, 3
    %499 = vrot.lane.b32.xlu0 %v498, 32
    %v500 = vpop.permute.xlu0 %499
    %v501 = vsel %vm159, %v500, 0
    %503 = vmatpush.msra.mxu0 0.0
    %504 = vmatpush.msra.mxu0 0.0
    %505 = vmatpush.msra.mxu0 0.0
    %506 = vmatpush.msra.mxu0 0.0
    %507 = vmatpush.msra.mxu0 0.0
    %508 = vmatpush.msra.mxu0 0.0
    %509 = vmatpush.msra.mxu0 0.0
    %510 = vmatpush.msra.mxu0 0.0
    %511 = vmatpush.msra.mxu0 0.0
    %512 = vmatpush.msra.mxu0 0.0
    %513 = vmatpush.msra.mxu0 0.0
    %514 = vmatpush.msra.mxu0 0.0
    %515 = vmatpush.msra.mxu0 %v186
    %516 = vmatpush.msra.mxu0 %v185
    %517 = vmatpush.msra.mxu0 %v184
    %518 = vmatpush.msra.mxu0 %v183
    %519 = vmatmul.f32.gmra.mxu0 %v501
    %v520 = vpop.f32.mrf.mxu0
    %v521 = vadd.f32 0.0, %v520
    %522 = vdwg.mxu0
    %v524 = vrot.slane %v521, 4
    %v526 = vadd.f32 %v218, %v524
    %v527 = vxor.u32 %v526, 2147483648
    %v528 = vmul.f32 %v527, 1.442695
    %v529 = vpow.pop %v528
    %v530 = vadd.f32 %v529, 1.0
    %v531 = vrcp.pop %v530
    %v532 = vmul.f32 %v530, %v531
    %v533 = vsub.f32 1.0, %v532
    %v534 = vmul.f32 %v531, %v533
    %v535 = vadd.f32 %v531, %v534
    %vm536 = vweird.f32 %v530
    %vm537 = vweird.f32 %v531
    %vm538 = vmor %vm536, %vm537
    %v539 = vsel %vm538, %v531, %v535
    %v540 = vand.u32 2147483647, %v530
    %vm541 = vcmp.eq.f32.partialorder %v540, 8.507059e+37
    %v542 = vand.u32 %v530, 2147483648
    %v543 = vor.u32 1.1754944e-38, %v542
    %v544 = vsel %vm541, %v543, %v539
    %v545 = vmul.f32 1.0, %v544
    %v546 = vtanh.pop %v526
    %v548 = vrot.slane %v490, 7
    %v550 = vmul.f32 %v545, %v548
    %552 = vrot.lane.b32.xlu0 %v546, 64
    %v553 = vpop.permute.xlu0 %552
    %v555 = vmul.f32 %v545, %v553
    %557 = vrot.lane.b32.xlu0 %v555, 32
    %v558 = vpop.permute.xlu0 %557
    %v560 = vadd.f32 %v550, %v558
    %v561 = vtanh.pop %v560
    %563 = vrot.lane.b32.xlu0 %v561, 64
    %v564 = vpop.permute.xlu0 %563
    %v566 = vmul.f32 %v545, %v564
    %v568 = vrot.slane %v566, 4
    %569 = vrot.lane.b32.xlu0 %v568, 32
    %v570 = vpop.permute.xlu0 %569
    %v571 = vsel %vm159, %v570, 0
    %573 = vmatpush.msra.mxu0 0.0
    %574 = vmatpush.msra.mxu0 0.0
    %575 = vmatpush.msra.mxu0 0.0
    %576 = vmatpush.msra.mxu0 0.0
    %577 = vmatpush.msra.mxu0 0.0
    %578 = vmatpush.msra.mxu0 0.0
    %579 = vmatpush.msra.mxu0 0.0
    %580 = vmatpush.msra.mxu0 0.0
    %581 = vmatpush.msra.mxu0 0.0
    %582 = vmatpush.msra.mxu0 0.0
    %583 = vmatpush.msra.mxu0 0.0
    %584 = vmatpush.msra.mxu0 0.0
    %585 = vmatpush.msra.mxu0 %v186
    %586 = vmatpush.msra.mxu0 %v185
    %587 = vmatpush.msra.mxu0 %v184
    %588 = vmatpush.msra.mxu0 %v183
    %589 = vmatmul.f32.gmra.mxu0 %v571
    %v590 = vpop.f32.mrf.mxu0
    %v591 = vadd.f32 0.0, %v590
    %592 = vdwg.mxu0
    %v594 = vrot.slane %v591, 3
    %v596 = vadd.f32 %v218, %v594
    %v597 = vxor.u32 %v596, 2147483648
    %v598 = vmul.f32 %v597, 1.442695
    %v599 = vpow.pop %v598
    %v600 = vadd.f32 %v599, 1.0
    %v601 = vrcp.pop %v600
    %v602 = vmul.f32 %v600, %v601
    %v603 = vsub.f32 1.0, %v602
    %v604 = vmul.f32 %v601, %v603
    %v605 = vadd.f32 %v601, %v604
    %vm606 = vweird.f32 %v600
    %vm607 = vweird.f32 %v601
    %vm608 = vmor %vm606, %vm607
    %v609 = vsel %vm608, %v601, %v605
    %v610 = vand.u32 2147483647, %v600
    %vm611 = vcmp.eq.f32.partialorder %v610, 8.507059e+37
    %v612 = vand.u32 %v600, 2147483648
    %v613 = vor.u32 1.1754944e-38, %v612
    %v614 = vsel %vm611, %v613, %v609
    %v615 = vmul.f32 1.0, %v614
    %v616 = vtanh.pop %v596
    %v618 = vrot.slane %v560, 7
    %v620 = vmul.f32 %v615, %v618
    %622 = vrot.lane.b32.xlu0 %v616, 64
    %v623 = vpop.permute.xlu0 %622
    %v625 = vmul.f32 %v615, %v623
    %627 = vrot.lane.b32.xlu0 %v625, 32
    %v628 = vpop.permute.xlu0 %627
    %v630 = vadd.f32 %v620, %v628
    %v631 = vtanh.pop %v630
    %633 = vrot.lane.b32.xlu0 %v631, 64
    %v634 = vpop.permute.xlu0 %633
    %v636 = vmul.f32 %v615, %v634
    %v638 = vrot.slane %v636, 5
    %639 = vrot.lane.b32.xlu0 %v638, 32
    %v640 = vpop.permute.xlu0 %639
    %v641 = vsel %vm159, %v640, 0
    %643 = vmatpush.msra.mxu0 0.0
    %644 = vmatpush.msra.mxu0 0.0
    %645 = vmatpush.msra.mxu0 0.0
    %646 = vmatpush.msra.mxu0 0.0
    %647 = vmatpush.msra.mxu0 0.0
    %648 = vmatpush.msra.mxu0 0.0
    %649 = vmatpush.msra.mxu0 0.0
    %650 = vmatpush.msra.mxu0 0.0
    %651 = vmatpush.msra.mxu0 0.0
    %652 = vmatpush.msra.mxu0 0.0
    %653 = vmatpush.msra.mxu0 0.0
    %654 = vmatpush.msra.mxu0 0.0
    %655 = vmatpush.msra.mxu0 %v186
    %656 = vmatpush.msra.mxu0 %v185
    %657 = vmatpush.msra.mxu0 %v184
    %658 = vmatpush.msra.mxu0 %v183
    %659 = vmatmul.f32.gmra.mxu0 %v641
    %v660 = vpop.f32.mrf.mxu0
    %v661 = vadd.f32 0.0, %v660
    %662 = vdwg.mxu0
    %v664 = vrot.slane %v661, 2
    %v666 = vadd.f32 %v218, %v664
    %v667 = vxor.u32 %v666, 2147483648
    %v668 = vmul.f32 %v667, 1.442695
    %v669 = vpow.pop %v668
    %v670 = vadd.f32 %v669, 1.0
    %v671 = vrcp.pop %v670
    %v672 = vmul.f32 %v670, %v671
    %v673 = vsub.f32 1.0, %v672
    %v674 = vmul.f32 %v671, %v673
    %v675 = vadd.f32 %v671, %v674
    %vm676 = vweird.f32 %v670
    %vm677 = vweird.f32 %v671
    %vm678 = vmor %vm676, %vm677
    %v679 = vsel %vm678, %v671, %v675
    %v680 = vand.u32 2147483647, %v670
    %vm681 = vcmp.eq.f32.partialorder %v680, 8.507059e+37
    %v682 = vand.u32 %v670, 2147483648
    %v683 = vor.u32 1.1754944e-38, %v682
    %v684 = vsel %vm681, %v683, %v679
    %v685 = vmul.f32 1.0, %v684
    %v686 = vtanh.pop %v666
    %v688 = vrot.slane %v630, 7
    %v690 = vmul.f32 %v685, %v688
    %692 = vrot.lane.b32.xlu0 %v686, 64
    %v693 = vpop.permute.xlu0 %692
    %v695 = vmul.f32 %v685, %v693
    %697 = vrot.lane.b32.xlu0 %v695, 32
    %v698 = vpop.permute.xlu0 %697
    %v700 = vadd.f32 %v690, %v698
    %v701 = vtanh.pop %v700
    %703 = vrot.lane.b32.xlu0 %v701, 64
    %v704 = vpop.permute.xlu0 %703
    %v706 = vmul.f32 %v685, %v704
    %v708 = vrot.slane %v706, 6
    %709 = vrot.lane.b32.xlu0 %v708, 32
    %v710 = vpop.permute.xlu0 %709
    %v711 = vsel %vm159, %v710, 0
    %713 = vmatpush.msra.mxu0 0.0
    %714 = vmatpush.msra.mxu0 0.0
    %715 = vmatpush.msra.mxu0 0.0
    %716 = vmatpush.msra.mxu0 0.0
    %717 = vmatpush.msra.mxu0 0.0
    %718 = vmatpush.msra.mxu0 0.0
    %719 = vmatpush.msra.mxu0 0.0
    %720 = vmatpush.msra.mxu0 0.0
    %721 = vmatpush.msra.mxu0 0.0
    %722 = vmatpush.msra.mxu0 0.0
    %723 = vmatpush.msra.mxu0 0.0
    %724 = vmatpush.msra.mxu0 0.0
    %725 = vmatpush.msra.mxu0 %v186
    %726 = vmatpush.msra.mxu0 %v185
    %727 = vmatpush.msra.mxu0 %v184
    %728 = vmatpush.msra.mxu0 %v183
    %729 = vmatmul.f32.gmra.mxu0 %v711
    %v730 = vpop.f32.mrf.mxu0
    %v731 = vadd.f32 0.0, %v730
    %732 = vdwg.mxu0
    %v734 = vrot.slane %v731, 1
    %v736 = vadd.f32 %v218, %v734
    %v737 = vxor.u32 %v736, 2147483648
    %v738 = vmul.f32 %v737, 1.442695
    %v739 = vpow.pop %v738
    %v740 = vadd.f32 %v739, 1.0
    %v741 = vrcp.pop %v740
    %v742 = vmul.f32 %v740, %v741
    %v743 = vsub.f32 1.0, %v742
    %v744 = vmul.f32 %v741, %v743
    %v745 = vadd.f32 %v741, %v744
    %vm746 = vweird.f32 %v740
    %vm747 = vweird.f32 %v741
    %vm748 = vmor %vm746, %vm747
    %v749 = vsel %vm748, %v741, %v745
    %v750 = vand.u32 2147483647, %v740
    %vm751 = vcmp.eq.f32.partialorder %v750, 8.507059e+37
    %v752 = vand.u32 %v740, 2147483648
    %v753 = vor.u32 1.1754944e-38, %v752
    %v754 = vsel %vm751, %v753, %v749
    %v755 = vmul.f32 1.0, %v754
    %v756 = vtanh.pop %v736
    %v758 = vrot.slane %v700, 7
    %v760 = vmul.f32 %v755, %v758
    %762 = vrot.lane.b32.xlu0 %v756, 64
    %v763 = vpop.permute.xlu0 %762
    %v765 = vmul.f32 %v755, %v763
    %767 = vrot.lane.b32.xlu0 %v765, 32
    %v768 = vpop.permute.xlu0 %767
    %v770 = vadd.f32 %v760, %v768
    %v771 = vtanh.pop %v770
    %773 = vrot.lane.b32.xlu0 %v771, 64
    %v774 = vpop.permute.xlu0 %773
    %v776 = vmul.f32 %v755, %v774
    %778 = vrot.lane.b32.xlu0 %v776, 32
    %v779 = vpop.permute.xlu0 %778
    %vm781 = vcmask 261127
    %782 = vst.msk [vmem:[#allocation14 - $0x7] sm:$0x80] %vm781, %v779
    %784 = vrot.lane.b32.xlu0 %v770, 96
    %v785 = vpop.permute.xlu0 %784
    %787 = vst.msk [vmem:[#allocation16 - $0x7] sm:$0x80] %vm781, %v785
    %vm788 = vcmask 1040384
    %v789 = vsel %vm788, %v287, %v356
    %vm790 = vcmask 1041408
    %v791 = vsel %vm790, %v789, %v426
    %vm792 = vcmask 1042432
    %v793 = vsel %vm792, %v791, %v496
    %vm794 = vcmask 1043456
    %v795 = vsel %vm794, %v793, %v566
    %vm796 = vcmask 1044480
    %v797 = vsel %vm796, %v795, %v636
    %vm798 = vcmask 1045504
    %v799 = vsel %vm798, %v797, %v706
    %vm800 = vcmask 1046528
    %v801 = vsel %vm800, %v799, %v776
    %v802 = vld [vmem:[#allocation10] sm:$0xff]
    %v803 = vld [vmem:[#allocation10 + $0x8] sm:$0xff]
    %v804 = vld [vmem:[#allocation10 + $0x10] sm:$0xff]
    %v805 = vld [vmem:[#allocation10 + $0x18] sm:$0xff]
    %v806 = vld [vmem:[%s10] sm:$0x1]
    %v807 = vld [vmem:[%s11] sm:$0x1]
    %v808 = vadd.f32 %v806, %v807
    %v809 = vld [vmem:[#allocation8] sm:$0xff]
    %v810 = vld [vmem:[#allocation8 + $0x8] sm:$0xff]
    %v811 = vld [vmem:[#allocation8 + $0x10] sm:$0xff]
    %v812 = vld [vmem:[#allocation8 + $0x18] sm:$0xff]
    %v814 = vperm.slane %v808, 0
    %817 = vrot.lane.b32.xlu0 %v801, 32
    %v818 = vpop.permute.xlu0 %817
    %v819 = vsel %vm159, %v818, 0
    %821 = vmatpush.msra.mxu0 0.0
    %822 = vmatpush.msra.mxu0 0.0
    %823 = vmatpush.msra.mxu0 0.0
    %824 = vmatpush.msra.mxu0 0.0
    %825 = vmatpush.msra.mxu0 0.0
    %826 = vmatpush.msra.mxu0 0.0
    %827 = vmatpush.msra.mxu0 0.0
    %828 = vmatpush.msra.mxu0 0.0
    %829 = vmatpush.msra.mxu0 0.0
    %830 = vmatpush.msra.mxu0 0.0
    %831 = vmatpush.msra.mxu0 0.0
    %832 = vmatpush.msra.mxu0 0.0
    %833 = vmatpush.msra.mxu0 %v812
    %834 = vmatpush.msra.mxu0 %v811
    %835 = vmatpush.msra.mxu0 %v810
    %836 = vmatpush.msra.mxu0 %v809
    %837 = vmatmul.f32.gmra.mxu0 %v819
    %v838 = vpop.f32.mrf.mxu0
    %v839 = vadd.f32 %v814, %v838
    %840 = vdwg.mxu0
    %s841 = scalar_lea.vmem %s2, 1
    %v842 = vld [vmem:[%s841] sm:$0x1]
    %s843 = scalar_lea.vmem %s3, 1
    %v844 = vld [vmem:[%s843] sm:$0x1]
    %v846 = vsel %vm159, %v842, 0
    %848 = vmatpush.msra.mxu0 0.0
    %849 = vmatpush.msra.mxu0 0.0
    %850 = vmatpush.msra.mxu0 0.0
    %851 = vmatpush.msra.mxu0 0.0
    %852 = vmatpush.msra.mxu0 0.0
    %853 = vmatpush.msra.mxu0 0.0
    %854 = vmatpush.msra.mxu0 0.0
    %855 = vmatpush.msra.mxu0 0.0
    %856 = vmatpush.msra.mxu0 0.0
    %857 = vmatpush.msra.mxu0 0.0
    %858 = vmatpush.msra.mxu0 0.0
    %859 = vmatpush.msra.mxu0 0.0
    %860 = vmatpush.msra.mxu0 %v805
    %861 = vmatpush.msra.mxu0 %v804
    %862 = vmatpush.msra.mxu0 %v803
    %863 = vmatpush.msra.mxu0 %v802
    %864 = vmatmul.f32.gmra.mxu0 %v846
    %v865 = vpop.f32.mrf.mxu0
    %v866 = vadd.f32 0.0, %v865
    %867 = vdwg.mxu0
    %v868 = vadd.f32 %v839, %v866
    %v869 = vxor.u32 %v868, 2147483648
    %v870 = vmul.f32 %v869, 1.442695
    %v871 = vpow.pop %v870
    %v872 = vadd.f32 %v871, 1.0
    %v873 = vrcp.pop %v872
    %v874 = vmul.f32 %v872, %v873
    %v875 = vsub.f32 1.0, %v874
    %v876 = vmul.f32 %v873, %v875
    %v877 = vadd.f32 %v873, %v876
    %vm878 = vweird.f32 %v872
    %vm879 = vweird.f32 %v873
    %vm880 = vmor %vm878, %vm879
    %v881 = vsel %vm880, %v873, %v877
    %v882 = vand.u32 2147483647, %v872
    %vm883 = vcmp.eq.f32.partialorder %v882, 8.507059e+37
    %v884 = vand.u32 %v872, 2147483648
    %v885 = vor.u32 1.1754944e-38, %v884
    %v886 = vsel %vm883, %v885, %v881
    %v887 = vmul.f32 1.0, %v886
    %v888 = vtanh.pop %v868
    %v890 = vperm.slane %v844, 0
    %891 = vrot.lane.b32.xlu0 %v890, 32
    %v892 = vpop.permute.xlu0 %891
    %v894 = vmul.f32 %v887, %v892
    %896 = vrot.lane.b32.xlu0 %v888, 64
    %v897 = vpop.permute.xlu0 %896
    %v899 = vmul.f32 %v887, %v897
    %901 = vrot.lane.b32.xlu0 %v899, 32
    %v902 = vpop.permute.xlu0 %901
    %v904 = vadd.f32 %v894, %v902
    %v905 = vtanh.pop %v904
    %907 = vrot.lane.b32.xlu0 %v905, 64
    %v908 = vpop.permute.xlu0 %907
    %v910 = vmul.f32 %v887, %v908
    %912 = vrot.lane.b32.xlu0 %v910, 32
    %v913 = vpop.permute.xlu0 %912
    %v914 = vsel %vm159, %v913, 0
    %916 = vmatpush.msra.mxu0 0.0
    %917 = vmatpush.msra.mxu0 0.0
    %918 = vmatpush.msra.mxu0 0.0
    %919 = vmatpush.msra.mxu0 0.0
    %920 = vmatpush.msra.mxu0 0.0
    %921 = vmatpush.msra.mxu0 0.0
    %922 = vmatpush.msra.mxu0 0.0
    %923 = vmatpush.msra.mxu0 0.0
    %924 = vmatpush.msra.mxu0 0.0
    %925 = vmatpush.msra.mxu0 0.0
    %926 = vmatpush.msra.mxu0 0.0
    %927 = vmatpush.msra.mxu0 0.0
    %928 = vmatpush.msra.mxu0 %v805
    %929 = vmatpush.msra.mxu0 %v804
    %930 = vmatpush.msra.mxu0 %v803
    %931 = vmatpush.msra.mxu0 %v802
    %932 = vmatmul.f32.gmra.mxu0 %v914
    %v933 = vpop.f32.mrf.mxu0
    %v934 = vadd.f32 0.0, %v933
    %935 = vdwg.mxu0
    %v937 = vrot.slane %v934, 7
    %v939 = vadd.f32 %v839, %v937
    %v940 = vxor.u32 %v939, 2147483648
    %v941 = vmul.f32 %v940, 1.442695
    %v942 = vpow.pop %v941
    %v943 = vadd.f32 %v942, 1.0
    %v944 = vrcp.pop %v943
    %v945 = vmul.f32 %v943, %v944
    %v946 = vsub.f32 1.0, %v945
    %v947 = vmul.f32 %v944, %v946
    %v948 = vadd.f32 %v944, %v947
    %vm949 = vweird.f32 %v943
    %vm950 = vweird.f32 %v944
    %vm951 = vmor %vm949, %vm950
    %v952 = vsel %vm951, %v944, %v948
    %v953 = vand.u32 2147483647, %v943
    %vm954 = vcmp.eq.f32.partialorder %v953, 8.507059e+37
    %v955 = vand.u32 %v943, 2147483648
    %v956 = vor.u32 1.1754944e-38, %v955
    %v957 = vsel %vm954, %v956, %v952
    %v958 = vmul.f32 1.0, %v957
    %v959 = vtanh.pop %v939
    %v961 = vrot.slane %v904, 7
    %v963 = vmul.f32 %v958, %v961
    %965 = vrot.lane.b32.xlu0 %v959, 64
    %v966 = vpop.permute.xlu0 %965
    %v968 = vmul.f32 %v958, %v966
    %970 = vrot.lane.b32.xlu0 %v968, 32
    %v971 = vpop.permute.xlu0 %970
    %v973 = vadd.f32 %v963, %v971
    %v974 = vtanh.pop %v973
    %976 = vrot.lane.b32.xlu0 %v974, 64
    %v977 = vpop.permute.xlu0 %976
    %v979 = vmul.f32 %v958, %v977
    %v981 = vrot.slane %v979, 1
    %982 = vrot.lane.b32.xlu0 %v981, 32
    %v983 = vpop.permute.xlu0 %982
    %v984 = vsel %vm159, %v983, 0
    %986 = vmatpush.msra.mxu0 0.0
    %987 = vmatpush.msra.mxu0 0.0
    %988 = vmatpush.msra.mxu0 0.0
    %989 = vmatpush.msra.mxu0 0.0
    %990 = vmatpush.msra.mxu0 0.0
    %991 = vmatpush.msra.mxu0 0.0
    %992 = vmatpush.msra.mxu0 0.0
    %993 = vmatpush.msra.mxu0 0.0
    %994 = vmatpush.msra.mxu0 0.0
    %995 = vmatpush.msra.mxu0 0.0
    %996 = vmatpush.msra.mxu0 0.0
    %997 = vmatpush.msra.mxu0 0.0
    %998 = vmatpush.msra.mxu0 %v805
    %999 = vmatpush.msra.mxu0 %v804
    %1000 = vmatpush.msra.mxu0 %v803
    %1001 = vmatpush.msra.mxu0 %v802
    %1002 = vmatmul.f32.gmra.mxu0 %v984
    %v1003 = vpop.f32.mrf.mxu0
    %v1004 = vadd.f32 0.0, %v1003
    %1005 = vdwg.mxu0
    %v1007 = vrot.slane %v1004, 6
    %v1009 = vadd.f32 %v839, %v1007
    %v1010 = vxor.u32 %v1009, 2147483648
    %v1011 = vmul.f32 %v1010, 1.442695
    %v1012 = vpow.pop %v1011
    %v1013 = vadd.f32 %v1012, 1.0
    %v1014 = vrcp.pop %v1013
    %v1015 = vmul.f32 %v1013, %v1014
    %v1016 = vsub.f32 1.0, %v1015
    %v1017 = vmul.f32 %v1014, %v1016
    %v1018 = vadd.f32 %v1014, %v1017
    %vm1019 = vweird.f32 %v1013
    %vm1020 = vweird.f32 %v1014
    %vm1021 = vmor %vm1019, %vm1020
    %v1022 = vsel %vm1021, %v1014, %v1018
    %v1023 = vand.u32 2147483647, %v1013
    %vm1024 = vcmp.eq.f32.partialorder %v1023, 8.507059e+37
    %v1025 = vand.u32 %v1013, 2147483648
    %v1026 = vor.u32 1.1754944e-38, %v1025
    %v1027 = vsel %vm1024, %v1026, %v1022
    %v1028 = vmul.f32 1.0, %v1027
    %v1029 = vtanh.pop %v1009
    %v1031 = vrot.slane %v973, 7
    %v1033 = vmul.f32 %v1028, %v1031
    %1035 = vrot.lane.b32.xlu0 %v1029, 64
    %v1036 = vpop.permute.xlu0 %1035
    %v1038 = vmul.f32 %v1028, %v1036
    %1040 = vrot.lane.b32.xlu0 %v1038, 32
    %v1041 = vpop.permute.xlu0 %1040
    %v1043 = vadd.f32 %v1033, %v1041
    %v1044 = vtanh.pop %v1043
    %1046 = vrot.lane.b32.xlu0 %v1044, 64
    %v1047 = vpop.permute.xlu0 %1046
    %v1049 = vmul.f32 %v1028, %v1047
    %v1051 = vrot.slane %v1049, 2
    %1052 = vrot.lane.b32.xlu0 %v1051, 32
    %v1053 = vpop.permute.xlu0 %1052
    %v1054 = vsel %vm159, %v1053, 0
    %1056 = vmatpush.msra.mxu0 0.0
    %1057 = vmatpush.msra.mxu0 0.0
    %1058 = vmatpush.msra.mxu0 0.0
    %1059 = vmatpush.msra.mxu0 0.0
    %1060 = vmatpush.msra.mxu0 0.0
    %1061 = vmatpush.msra.mxu0 0.0
    %1062 = vmatpush.msra.mxu0 0.0
    %1063 = vmatpush.msra.mxu0 0.0
    %1064 = vmatpush.msra.mxu0 0.0
    %1065 = vmatpush.msra.mxu0 0.0
    %1066 = vmatpush.msra.mxu0 0.0
    %1067 = vmatpush.msra.mxu0 0.0
    %1068 = vmatpush.msra.mxu0 %v805
    %1069 = vmatpush.msra.mxu0 %v804
    %1070 = vmatpush.msra.mxu0 %v803
    %1071 = vmatpush.msra.mxu0 %v802
    %1072 = vmatmul.f32.gmra.mxu0 %v1054
    %v1073 = vpop.f32.mrf.mxu0
    %v1074 = vadd.f32 0.0, %v1073
    %1075 = vdwg.mxu0
    %v1077 = vrot.slane %v1074, 5
    %v1079 = vadd.f32 %v839, %v1077
    %v1080 = vxor.u32 %v1079, 2147483648
    %v1081 = vmul.f32 %v1080, 1.442695
    %v1082 = vpow.pop %v1081
    %v1083 = vadd.f32 %v1082, 1.0
    %v1084 = vrcp.pop %v1083
    %v1085 = vmul.f32 %v1083, %v1084
    %v1086 = vsub.f32 1.0, %v1085
    %v1087 = vmul.f32 %v1084, %v1086
    %v1088 = vadd.f32 %v1084, %v1087
    %vm1089 = vweird.f32 %v1083
    %vm1090 = vweird.f32 %v1084
    %vm1091 = vmor %vm1089, %vm1090
    %v1092 = vsel %vm1091, %v1084, %v1088
    %v1093 = vand.u32 2147483647, %v1083
    %vm1094 = vcmp.eq.f32.partialorder %v1093, 8.507059e+37
    %v1095 = vand.u32 %v1083, 2147483648
    %v1096 = vor.u32 1.1754944e-38, %v1095
    %v1097 = vsel %vm1094, %v1096, %v1092
    %v1098 = vmul.f32 1.0, %v1097
    %v1099 = vtanh.pop %v1079
    %v1101 = vrot.slane %v1043, 7
    %v1103 = vmul.f32 %v1098, %v1101
    %1105 = vrot.lane.b32.xlu0 %v1099, 64
    %v1106 = vpop.permute.xlu0 %1105
    %v1108 = vmul.f32 %v1098, %v1106
    %1110 = vrot.lane.b32.xlu0 %v1108, 32
    %v1111 = vpop.permute.xlu0 %1110
    %v1113 = vadd.f32 %v1103, %v1111
    %v1114 = vtanh.pop %v1113
    %1116 = vrot.lane.b32.xlu0 %v1114, 64
    %v1117 = vpop.permute.xlu0 %1116
    %v1119 = vmul.f32 %v1098, %v1117
    %v1121 = vrot.slane %v1119, 3
    %1122 = vrot.lane.b32.xlu0 %v1121, 32
    %v1123 = vpop.permute.xlu0 %1122
    %v1124 = vsel %vm159, %v1123, 0
    %1126 = vmatpush.msra.mxu0 0.0
    %1127 = vmatpush.msra.mxu0 0.0
    %1128 = vmatpush.msra.mxu0 0.0
    %1129 = vmatpush.msra.mxu0 0.0
    %1130 = vmatpush.msra.mxu0 0.0
    %1131 = vmatpush.msra.mxu0 0.0
    %1132 = vmatpush.msra.mxu0 0.0
    %1133 = vmatpush.msra.mxu0 0.0
    %1134 = vmatpush.msra.mxu0 0.0
    %1135 = vmatpush.msra.mxu0 0.0
    %1136 = vmatpush.msra.mxu0 0.0
    %1137 = vmatpush.msra.mxu0 0.0
    %1138 = vmatpush.msra.mxu0 %v805
    %1139 = vmatpush.msra.mxu0 %v804
    %1140 = vmatpush.msra.mxu0 %v803
    %1141 = vmatpush.msra.mxu0 %v802
    %1142 = vmatmul.f32.gmra.mxu0 %v1124
    %v1143 = vpop.f32.mrf.mxu0
    %v1144 = vadd.f32 0.0, %v1143
    %1145 = vdwg.mxu0
    %v1147 = vrot.slane %v1144, 4
    %v1149 = vadd.f32 %v839, %v1147
    %v1150 = vxor.u32 %v1149, 2147483648
    %v1151 = vmul.f32 %v1150, 1.442695
    %v1152 = vpow.pop %v1151
    %v1153 = vadd.f32 %v1152, 1.0
    %v1154 = vrcp.pop %v1153
    %v1155 = vmul.f32 %v1153, %v1154
    %v1156 = vsub.f32 1.0, %v1155
    %v1157 = vmul.f32 %v1154, %v1156
    %v1158 = vadd.f32 %v1154, %v1157
    %vm1159 = vweird.f32 %v1153
    %vm1160 = vweird.f32 %v1154
    %vm1161 = vmor %vm1159, %vm1160
    %v1162 = vsel %vm1161, %v1154, %v1158
    %v1163 = vand.u32 2147483647, %v1153
    %vm1164 = vcmp.eq.f32.partialorder %v1163, 8.507059e+37
    %v1165 = vand.u32 %v1153, 2147483648
    %v1166 = vor.u32 1.1754944e-38, %v1165
    %v1167 = vsel %vm1164, %v1166, %v1162
    %v1168 = vmul.f32 1.0, %v1167
    %v1169 = vtanh.pop %v1149
    %v1171 = vrot.slane %v1113, 7
    %v1173 = vmul.f32 %v1168, %v1171
    %1175 = vrot.lane.b32.xlu0 %v1169, 64
    %v1176 = vpop.permute.xlu0 %1175
    %v1178 = vmul.f32 %v1168, %v1176
    %1180 = vrot.lane.b32.xlu0 %v1178, 32
    %v1181 = vpop.permute.xlu0 %1180
    %v1183 = vadd.f32 %v1173, %v1181
    %v1184 = vtanh.pop %v1183
    %1186 = vrot.lane.b32.xlu0 %v1184, 64
    %v1187 = vpop.permute.xlu0 %1186
    %v1189 = vmul.f32 %v1168, %v1187
    %v1191 = vrot.slane %v1189, 4
    %1192 = vrot.lane.b32.xlu0 %v1191, 32
    %v1193 = vpop.permute.xlu0 %1192
    %v1194 = vsel %vm159, %v1193, 0
    %1196 = vmatpush.msra.mxu0 0.0
    %1197 = vmatpush.msra.mxu0 0.0
    %1198 = vmatpush.msra.mxu0 0.0
    %1199 = vmatpush.msra.mxu0 0.0
    %1200 = vmatpush.msra.mxu0 0.0
    %1201 = vmatpush.msra.mxu0 0.0
    %1202 = vmatpush.msra.mxu0 0.0
    %1203 = vmatpush.msra.mxu0 0.0
    %1204 = vmatpush.msra.mxu0 0.0
    %1205 = vmatpush.msra.mxu0 0.0
    %1206 = vmatpush.msra.mxu0 0.0
    %1207 = vmatpush.msra.mxu0 0.0
    %1208 = vmatpush.msra.mxu0 %v805
    %1209 = vmatpush.msra.mxu0 %v804
    %1210 = vmatpush.msra.mxu0 %v803
    %1211 = vmatpush.msra.mxu0 %v802
    %1212 = vmatmul.f32.gmra.mxu0 %v1194
    %v1213 = vpop.f32.mrf.mxu0
    %v1214 = vadd.f32 0.0, %v1213
    %1215 = vdwg.mxu0
    %v1217 = vrot.slane %v1214, 3
    %v1219 = vadd.f32 %v839, %v1217
    %v1220 = vxor.u32 %v1219, 2147483648
    %v1221 = vmul.f32 %v1220, 1.442695
    %v1222 = vpow.pop %v1221
    %v1223 = vadd.f32 %v1222, 1.0
    %v1224 = vrcp.pop %v1223
    %v1225 = vmul.f32 %v1223, %v1224
    %v1226 = vsub.f32 1.0, %v1225
    %v1227 = vmul.f32 %v1224, %v1226
    %v1228 = vadd.f32 %v1224, %v1227
    %vm1229 = vweird.f32 %v1223
    %vm1230 = vweird.f32 %v1224
    %vm1231 = vmor %vm1229, %vm1230
    %v1232 = vsel %vm1231, %v1224, %v1228
    %v1233 = vand.u32 2147483647, %v1223
    %vm1234 = vcmp.eq.f32.partialorder %v1233, 8.507059e+37
    %v1235 = vand.u32 %v1223, 2147483648
    %v1236 = vor.u32 1.1754944e-38, %v1235
    %v1237 = vsel %vm1234, %v1236, %v1232
    %v1238 = vmul.f32 1.0, %v1237
    %v1239 = vtanh.pop %v1219
    %v1241 = vrot.slane %v1183, 7
    %v1243 = vmul.f32 %v1238, %v1241
    %1245 = vrot.lane.b32.xlu0 %v1239, 64
    %v1246 = vpop.permute.xlu0 %1245
    %v1248 = vmul.f32 %v1238, %v1246
    %1250 = vrot.lane.b32.xlu0 %v1248, 32
    %v1251 = vpop.permute.xlu0 %1250
    %v1253 = vadd.f32 %v1243, %v1251
    %v1254 = vtanh.pop %v1253
    %1256 = vrot.lane.b32.xlu0 %v1254, 64
    %v1257 = vpop.permute.xlu0 %1256
    %v1259 = vmul.f32 %v1238, %v1257
    %v1261 = vrot.slane %v1259, 5
    %1262 = vrot.lane.b32.xlu0 %v1261, 32
    %v1263 = vpop.permute.xlu0 %1262
    %v1264 = vsel %vm159, %v1263, 0
    %1266 = vmatpush.msra.mxu0 0.0
    %1267 = vmatpush.msra.mxu0 0.0
    %1268 = vmatpush.msra.mxu0 0.0
    %1269 = vmatpush.msra.mxu0 0.0
    %1270 = vmatpush.msra.mxu0 0.0
    %1271 = vmatpush.msra.mxu0 0.0
    %1272 = vmatpush.msra.mxu0 0.0
    %1273 = vmatpush.msra.mxu0 0.0
    %1274 = vmatpush.msra.mxu0 0.0
    %1275 = vmatpush.msra.mxu0 0.0
    %1276 = vmatpush.msra.mxu0 0.0
    %1277 = vmatpush.msra.mxu0 0.0
    %1278 = vmatpush.msra.mxu0 %v805
    %1279 = vmatpush.msra.mxu0 %v804
    %1280 = vmatpush.msra.mxu0 %v803
    %1281 = vmatpush.msra.mxu0 %v802
    %1282 = vmatmul.f32.gmra.mxu0 %v1264
    %v1283 = vpop.f32.mrf.mxu0
    %v1284 = vadd.f32 0.0, %v1283
    %1285 = vdwg.mxu0
    %v1287 = vrot.slane %v1284, 2
    %v1289 = vadd.f32 %v839, %v1287
    %v1290 = vxor.u32 %v1289, 2147483648
    %v1291 = vmul.f32 %v1290, 1.442695
    %v1292 = vpow.pop %v1291
    %v1293 = vadd.f32 %v1292, 1.0
    %v1294 = vrcp.pop %v1293
    %v1295 = vmul.f32 %v1293, %v1294
    %v1296 = vsub.f32 1.0, %v1295
    %v1297 = vmul.f32 %v1294, %v1296
    %v1298 = vadd.f32 %v1294, %v1297
    %vm1299 = vweird.f32 %v1293
    %vm1300 = vweird.f32 %v1294
    %vm1301 = vmor %vm1299, %vm1300
    %v1302 = vsel %vm1301, %v1294, %v1298
    %v1303 = vand.u32 2147483647, %v1293
    %vm1304 = vcmp.eq.f32.partialorder %v1303, 8.507059e+37
    %v1305 = vand.u32 %v1293, 2147483648
    %v1306 = vor.u32 1.1754944e-38, %v1305
    %v1307 = vsel %vm1304, %v1306, %v1302
    %v1308 = vmul.f32 1.0, %v1307
    %v1309 = vtanh.pop %v1289
    %v1311 = vrot.slane %v1253, 7
    %v1313 = vmul.f32 %v1308, %v1311
    %1315 = vrot.lane.b32.xlu0 %v1309, 64
    %v1316 = vpop.permute.xlu0 %1315
    %v1318 = vmul.f32 %v1308, %v1316
    %1320 = vrot.lane.b32.xlu0 %v1318, 32
    %v1321 = vpop.permute.xlu0 %1320
    %v1323 = vadd.f32 %v1313, %v1321
    %v1324 = vtanh.pop %v1323
    %1326 = vrot.lane.b32.xlu0 %v1324, 64
    %v1327 = vpop.permute.xlu0 %1326
    %v1329 = vmul.f32 %v1308, %v1327
    %v1331 = vrot.slane %v1329, 6
    %1332 = vrot.lane.b32.xlu0 %v1331, 32
    %v1333 = vpop.permute.xlu0 %1332
    %v1334 = vsel %vm159, %v1333, 0
    %1336 = vmatpush.msra.mxu0 0.0
    %1337 = vmatpush.msra.mxu0 0.0
    %1338 = vmatpush.msra.mxu0 0.0
    %1339 = vmatpush.msra.mxu0 0.0
    %1340 = vmatpush.msra.mxu0 0.0
    %1341 = vmatpush.msra.mxu0 0.0
    %1342 = vmatpush.msra.mxu0 0.0
    %1343 = vmatpush.msra.mxu0 0.0
    %1344 = vmatpush.msra.mxu0 0.0
    %1345 = vmatpush.msra.mxu0 0.0
    %1346 = vmatpush.msra.mxu0 0.0
    %1347 = vmatpush.msra.mxu0 0.0
    %1348 = vmatpush.msra.mxu0 %v805
    %1349 = vmatpush.msra.mxu0 %v804
    %1350 = vmatpush.msra.mxu0 %v803
    %1351 = vmatpush.msra.mxu0 %v802
    %1352 = vmatmul.f32.gmra.mxu0 %v1334
    %v1353 = vpop.f32.mrf.mxu0
    %v1354 = vadd.f32 0.0, %v1353
    %1355 = vdwg.mxu0
    %v1357 = vrot.slane %v1354, 1
    %v1359 = vadd.f32 %v839, %v1357
    %v1360 = vxor.u32 %v1359, 2147483648
    %v1361 = vmul.f32 %v1360, 1.442695
    %v1362 = vpow.pop %v1361
    %v1363 = vadd.f32 %v1362, 1.0
    %v1364 = vrcp.pop %v1363
    %v1365 = vmul.f32 %v1363, %v1364
    %v1366 = vsub.f32 1.0, %v1365
    %v1367 = vmul.f32 %v1364, %v1366
    %v1368 = vadd.f32 %v1364, %v1367
    %vm1369 = vweird.f32 %v1363
    %vm1370 = vweird.f32 %v1364
    %vm1371 = vmor %vm1369, %vm1370
    %v1372 = vsel %vm1371, %v1364, %v1368
    %v1373 = vand.u32 2147483647, %v1363
    %vm1374 = vcmp.eq.f32.partialorder %v1373, 8.507059e+37
    %v1375 = vand.u32 %v1363, 2147483648
    %v1376 = vor.u32 1.1754944e-38, %v1375
    %v1377 = vsel %vm1374, %v1376, %v1372
    %v1378 = vmul.f32 1.0, %v1377
    %v1379 = vtanh.pop %v1359
    %v1381 = vrot.slane %v1323, 7
    %v1383 = vmul.f32 %v1378, %v1381
    %1385 = vrot.lane.b32.xlu0 %v1379, 64
    %v1386 = vpop.permute.xlu0 %1385
    %v1388 = vmul.f32 %v1378, %v1386
    %1390 = vrot.lane.b32.xlu0 %v1388, 32
    %v1391 = vpop.permute.xlu0 %1390
    %v1393 = vadd.f32 %v1383, %v1391
    %v1394 = vtanh.pop %v1393
    %1396 = vrot.lane.b32.xlu0 %v1394, 64
    %v1397 = vpop.permute.xlu0 %1396
    %v1399 = vmul.f32 %v1378, %v1397
    %1401 = vrot.lane.b32.xlu0 %v1399, 32
    %v1402 = vpop.permute.xlu0 %1401
    %s1404 = scalar_lea.vmem [#allocation14], 1
    %1405 = vst.msk [vmem:[%s1404 - $0x7] sm:$0x80] %vm781, %v1402
    %1407 = vrot.lane.b32.xlu0 %v1393, 96
    %v1408 = vpop.permute.xlu0 %1407
    %s1410 = scalar_lea.vmem [#allocation16], 1
    %1411 = vst.msk [vmem:[%s1410 - $0x7] sm:$0x80] %vm781, %v1408
    %v1412 = vsel %vm788, %v910, %v979
    %v1413 = vsel %vm790, %v1412, %v1049
    %v1414 = vsel %vm792, %v1413, %v1119
    %v1415 = vsel %vm794, %v1414, %v1189
    %v1416 = vsel %vm796, %v1415, %v1259
    %v1417 = vsel %vm798, %v1416, %v1329
    %v1418 = vsel %vm800, %v1417, %v1399
    %v1419 = vld [vmem:[#allocation11] sm:$0xff]
    %v1420 = vld [vmem:[#allocation11 + $0x8] sm:$0xff]
    %v1421 = vld [vmem:[#allocation11 + $0x10] sm:$0xff]
    %v1422 = vld [vmem:[#allocation11 + $0x18] sm:$0xff]
    %v1423 = vld [vmem:[%s13] sm:$0x1]
    %v1425 = vperm.slane %v1423, 0
    %1428 = vrot.lane.b32.xlu0 %v1418, 32
    %v1429 = vpop.permute.xlu0 %1428
    %v1430 = vsel %vm159, %v1429, 0
    %1432 = vmatpush.msra.mxu0 0.0
    %1433 = vmatpush.msra.mxu0 0.0
    %1434 = vmatpush.msra.mxu0 0.0
    %1435 = vmatpush.msra.mxu0 0.0
    %1436 = vmatpush.msra.mxu0 0.0
    %1437 = vmatpush.msra.mxu0 0.0
    %1438 = vmatpush.msra.mxu0 0.0
    %1439 = vmatpush.msra.mxu0 0.0
    %1440 = vmatpush.msra.mxu0 0.0
    %1441 = vmatpush.msra.mxu0 0.0
    %1442 = vmatpush.msra.mxu0 0.0
    %1443 = vmatpush.msra.mxu0 0.0
    %1444 = vmatpush.msra.mxu0 %v1422
    %1445 = vmatpush.msra.mxu0 %v1421
    %1446 = vmatpush.msra.mxu0 %v1420
    %1447 = vmatpush.msra.mxu0 %v1419
    %1448 = vmatmul.f32.gmra.mxu0 %v1430
    %v1449 = vpop.f32.mrf.mxu0
    %v1450 = vadd.f32 %v1425, %v1449
    %1451 = vdwg.mxu0
    %1452 = vst.msk [vmem:[#allocation13] sm:$0xff] %vm159, %v1450
    // Predicated region
    $region82: #{tpu_custom_call.1} parent=1 // pred_check
      _
    $region83: #{tpu_custom_call.1} parent=1 // pred_check_branch
      %1454 = sbr.rel (0) target = $region85
    $region84: #{tpu_custom_call.1} parent=1 // pred_region
      %1456 = vsyncadd [#allocation4], 0
      %s1458 = sshll.u32 [#allocation13], 4
      %s1459 = int_to_ptr.vmem [resolvable:$true] %s1458
      %s1460 = sshll.u32 %s14, 4
      %s1461 = int_to_ptr.hbm [resolvable:$true] %s1460
      %1463 = dma.vmem_to_hbm [thread:$0]  %s1459, 128, %s1461, [#allocation4]
    $region85: #{tpu_custom_call.1} parent=1 // pred_fallthru
      _
    // Predicated region
    $region86: #{tpu_custom_call.1} parent=1 // pred_check
      _
    $region87: #{tpu_custom_call.1} parent=1 // pred_check_branch
      %1465 = sbr.rel (0) target = $region89
    $region88: #{tpu_custom_call.1} parent=1 // pred_region
      %1467 = vsyncadd [#allocation15], 0
      %s1468 = sshll.u32 [#allocation14], 4
      %s1469 = int_to_ptr.vmem [resolvable:$true] %s1468
      %s1470 = sshll.u32 %s15, 4
      %s1471 = int_to_ptr.hbm [resolvable:$true] %s1470
      %1476 = dma.vmem_to_hbm [thread:$0]  %s1469, 32, %s1471, [#allocation15], 16, 16, 1
    $region89: #{tpu_custom_call.1} parent=1 // pred_fallthru
      _
    // Predicated region
    $region90: #{tpu_custom_call.1} parent=1 // pred_check
      _
    $region91: #{tpu_custom_call.1} parent=1 // pred_check_branch
      %1478 = sbr.rel (0) target = $region93
    $region92: #{tpu_custom_call.1} parent=1 // pred_region
      %1480 = vsyncadd [#allocation15], 0
      %s1481 = sshll.u32 [#allocation16], 4
      %s1482 = int_to_ptr.vmem [resolvable:$true] %s1481
      %s1483 = sshll.u32 %s16, 4
      %s1484 = int_to_ptr.hbm [resolvable:$true] %s1483
      %1489 = dma.vmem_to_hbm [thread:$0]  %s1482, 32, %s1484, [#allocation15], 16, 16, 1
    $region93: #{tpu_custom_call.1} parent=1 // pred_fallthru
      _
    // Predicated region
    $region94: #{tpu_custom_call.1} parent=1 // pred_check
      _
    $region95: #{tpu_custom_call.1} parent=1 // pred_check_branch
      %1491 = sbr.rel (0) target = $region97
    $region96: #{tpu_custom_call.1} parent=1 // pred_region
      %1493 = dma.done [#allocation4], 128
    $region97: #{tpu_custom_call.1} parent=1 // pred_fallthru
      _
    // Predicated region
    $region98: #{tpu_custom_call.1} parent=1 // pred_check
      _
    $region99: #{tpu_custom_call.1} parent=1 // pred_check_branch
      %1495 = sbr.rel (0) target = $region101
    $region100: #{tpu_custom_call.1} parent=1 // pred_region
      %1497 = dma.done [#allocation15], 32
    $region101: #{tpu_custom_call.1} parent=1 // pred_fallthru
      _
    // Predicated region
    $region102: #{tpu_custom_call.1} parent=1 // pred_check
      _
    $region103: #{tpu_custom_call.1} parent=1 // pred_check_branch
      %1499 = sbr.rel (0) target = $region105
    $region104: #{tpu_custom_call.1} parent=1 // pred_region
      %1501 = dma.done [#allocation15], 32
    $region105: #{tpu_custom_call.1} parent=1 // pred_fallthru
      _
    %1502 = vsyncpa [#allocation3], 1
    %1503 = vsyncpa [#allocation6], 1
    %1504 = vsyncpa [#allocation9], 1
    %1505 = vsyncpa [#allocation12], 1
    %1506 = vsyncpa [#allocation4], 1
    %1507 = vsyncpa [#allocation15], 1

</llo_original>
